<compile_context>
chip_gen: v7x
topology: tpu7x:2x2x1
jax: 0.10.0
libtpu: 0.0.40
codegen_flags: <defaults>
</compile_context>

<pallas_src>
import jax
import jax.numpy as jnp
from jax.experimental import pallas as pl
from jax.experimental.pallas import tpu as pltpu

# ---- problem constants (forced by Linear(in_features=14*14*16)) -----------------
B = 2
H = W = 28
PH = PW = 14
C1, C2, NCLS = 8, 16, 10
NPIX = PH * PW          # 196 pixels per image after the pool
PB = 256                # per-batch lane stride (196 real pixels + 60 zero pad lanes)
ROWSP = B * PB          # 512 lanes total; batch b occupies lanes [b*PB, b*PB+196)
GUARD = 128             # lane guard for the conv2 shift scratch (aligned stores)
EPS = 1e-5
TAPS = [(kh, kw) for kh in range(3) for kw in range(3)]
F32 = jnp.float32


def demo_kernel(act_ref, lin_ref, pvec_ref, w3_hbm, o_ref,
                h1pad_ref, im2_ref, w3_vmem, w3_sem):
    # Kick off the Linear-weight DMA immediately: it is not needed until the last
    # stage, so its ~160 KB transfer is hidden behind conv1/BN/conv2 compute.
    w3_copy = pltpu.make_async_copy(w3_hbm, w3_vmem, w3_sem.at[0])
    w3_copy.start()

    # ---- Conv2d(1->8,3x3,same) + AvgPool2d(2) fused: one (8,16)@(16,512) matmul --
    z1 = jnp.dot(pvec_ref[24:32, :], act_ref[0:16, :],
                 preferred_element_type=F32) + pvec_ref[0:8, 0:1]        # (8,512)
    z1 = z1 * act_ref[25:26, :]          # zero the 60 padding lanes of each batch

    # ---- BatchNorm2d(8): training-mode batch stats (biased var) + ReLU -----------
    inv_n = 1.0 / float(B * NPIX)
    mean = jnp.sum(z1, axis=1, keepdims=True) * inv_n                    # (8,1)
    ex2 = jnp.sum(z1 * z1, axis=1, keepdims=True) * inv_n
    var = jnp.maximum(ex2 - mean * mean, 0.0)                            # clamp >= 0
    h1 = (z1 - mean) * jax.lax.rsqrt(var + EPS) * pvec_ref[0:8, 1:2] + pvec_ref[0:8, 2:3]
    h1 = jnp.maximum(h1, 0.0)                                            # (8,512)

    # ---- Conv2d(8->16,3x3,same): build (72,512) im2col, ONE MXU matmul -----------
    # A spatial tap (dh,dw) is a lane shift by s = dh*14+dw; out-of-image taps are
    # zeroed by the precomputed masks, so the zero guard lanes never leak in.
    h1pad_ref[:, 0:GUARD] = jnp.zeros((C1, GUARD), F32)
    h1pad_ref[:, GUARD + ROWSP:GUARD + ROWSP + GUARD] = jnp.zeros((C1, GUARD), F32)
    h1pad_ref[:, GUARD:GUARD + ROWSP] = h1
    for t, (kh, kw) in enumerate(TAPS):
        s = (kh - 1) * PW + (kw - 1)
        shifted = h1pad_ref[:, GUARD + s:GUARD + s + ROWSP]              # (8,512)
        im2_ref[t * C1:(t + 1) * C1, :] = shifted * act_ref[16 + t:17 + t, :]
    h2 = jnp.dot(lin_ref[32:48, 0:9 * C1], im2_ref[...],
                 preferred_element_type=F32) + pvec_ref[0:16, 3:4]       # (16,512)
    h2 = jnp.maximum(h2, 0.0)

    # ---- Flatten + Linear(3136->10) + Softmax (per batch row) --------------------
    w3_copy.wait()                       # Linear weight is now resident in VMEM
    msel = lin_ref[0:16, :]              # (16,160): msel[c, j] = (j//10 == c)
    foldt = lin_ref[16:26, :]            # (10,160): foldt[o, j] = (j%10 == o)
    b3row = pvec_ref[16:17, 0:NCLS]      # (1,10)
    w3v = w3_vmem[...]                   # (256,160): w3v[hw, c*10+o] = w3[o, c*196+hw]
    for b in range(B):
        h2b = h2[:, b * PB:(b + 1) * PB]                                 # (16,256) aligned
        q = jnp.dot(h2b, w3v, preferred_element_type=F32)                # (16,160)
        zb = jax.lax.dot_general(q * msel, foldt,
                                 (((1,), (1,)), ((), ())),
                                 preferred_element_type=F32)             # (16,10)
        row = jnp.sum(zb, axis=0, keepdims=True) + b3row                 # (1,10) logits
        m = jnp.max(row, axis=1, keepdims=True)                          # softmax dim=1
        e = jnp.exp(row - m)
        o_ref[b:b + 1, :] = e / jnp.sum(e, axis=1, keepdims=True)


@jax.jit
def demo_forward(x, w1, b1, gamma, beta, w2, b2, w3, b3):
    """x: (B, 1, 28, 28) float32 NCHW (PyTorch convention). Returns (B, 10)."""
    # ---------- wrapper glue: pure data re-layout, no hoisted compute -------------
    # im2col for the fused conv1+pool (effective 4x4, stride 2), taps-on-sublane.
    xpad = jnp.pad(x[:, 0], ((0, 0), (1, 1), (1, 1)))                    # (B,30,30)
    cols = [xpad[:, eh:eh + 2 * PH:2, ew:ew + 2 * PW:2]
            for eh in range(4) for ew in range(4)]                       # (B,14,14) each
    p1 = jnp.stack(cols, axis=0).reshape(16, B, NPIX).astype(F32)        # (16,B,196)
    p1t = jnp.zeros((16, ROWSP), F32)
    for b in range(B):
        p1t = p1t.at[:, b * PB:b * PB + NPIX].set(p1[:, b, :])

    # effective 4x4 conv1 weights (0.25 pool factor folded in) -> (8,16)
    w1hwc = jnp.transpose(w1[:, 0], (1, 2, 0))                           # (3,3,8)
    w1e = jnp.zeros((4, 4, C1), F32)
    for dh in range(2):
        for dw in range(2):
            w1e = w1e.at[dh:dh + 3, dw:dw + 3, :].add(0.25 * w1hwc)
    w1et = w1e.reshape(16, C1).T                                         # (8,16)

    # conv2 per-tap validity masks (taps on sublanes, pixels on lanes) + pad mask
    lane = jnp.arange(ROWSP)
    hw = lane % PB
    ph = hw // PW
    pw = hw % PW
    real = hw < NPIX
    mrows = []
    for kh in range(3):
        for kw in range(3):
            dh, dw = kh - 1, kw - 1
            mrows.append(real & (ph + dh >= 0) & (ph + dh < PH)
                         & (pw + dw >= 0) & (pw + dw < PW))
    mask9 = jnp.stack(mrows, axis=0).astype(F32)                         # (9,512)

    act_slab = jnp.zeros((32, ROWSP), F32)                               # 1 DMA
    act_slab = act_slab.at[0:16, :].set(p1t)
    act_slab = act_slab.at[16:25, :].set(mask9)
    act_slab = act_slab.at[25, :].set(real.astype(F32))

    # conv2 weights as (16,72): w2m[co, (kh*3+kw)*8 + ci] = w2[co,ci,kh,kw]
    w2m = jnp.transpose(w2, (0, 2, 3, 1)).reshape(C2, 9 * C1).astype(F32)

    # Linear weight, un-duplicated: w3v[hw, c*10+o] = w3[o, c*196+hw] (hw<196, pad 256)
    w3r = w3.reshape(NCLS, C2, NPIX)
    w3v = jnp.zeros((PB, C2 * NCLS), F32)
    w3v = w3v.at[0:NPIX, :].set(jnp.transpose(w3r, (2, 1, 0)).reshape(NPIX, C2 * NCLS))

    msel = (jnp.arange(C2 * NCLS)[None, :] // NCLS
            == jnp.arange(C2)[:, None]).astype(F32)                      # (16,160)
    foldt = (jnp.arange(C2 * NCLS)[None, :] % NCLS
             == jnp.arange(NCLS)[:, None]).astype(F32)                   # (10,160)

    lin_slab = jnp.zeros((48, C2 * NCLS), F32)                           # 1 DMA
    lin_slab = lin_slab.at[0:16, :].set(msel)
    lin_slab = lin_slab.at[16:26, :].set(foldt)
    lin_slab = lin_slab.at[32:48, 0:9 * C1].set(w2m)

    pvec = jnp.zeros((32, 16), F32)                                      # 1 DMA
    pvec = pvec.at[0:8, 0].set(b1)
    pvec = pvec.at[0:8, 1].set(gamma)
    pvec = pvec.at[0:8, 2].set(beta)
    pvec = pvec.at[0:16, 3].set(b2)
    pvec = pvec.at[16, 0:NCLS].set(b3)
    pvec = pvec.at[24:32, :].set(w1et)

    flops = 2 * (C1 * 16 * ROWSP + C2 * 9 * C1 * ROWSP
                 + B * (C2 * PB * C2 * NCLS + C2 * C2 * NCLS * NCLS))
    bytes_accessed = int((32 * ROWSP + 48 * C2 * NCLS + 32 * 16
                          + PB * C2 * NCLS + B * NCLS) * 4)

    out = pl.pallas_call(
        demo_kernel,
        out_shape=jax.ShapeDtypeStruct((B, NCLS), F32),
        grid_spec=pltpu.PrefetchScalarGridSpec(
            num_scalar_prefetch=0,
            grid=(1,),                       # single step: whole problem fits VMEM
            in_specs=[
                pl.BlockSpec((32, ROWSP), lambda i: (0, 0)),
                pl.BlockSpec((48, C2 * NCLS), lambda i: (0, 0)),
                pl.BlockSpec((32, 16), lambda i: (0, 0)),
                pl.BlockSpec(memory_space=pl.ANY),   # w3v: manual, overlapped DMA
            ],
            out_specs=pl.BlockSpec((B, NCLS), lambda i: (0, 0)),
            scratch_shapes=[
                pltpu.VMEM((C1, GUARD + ROWSP + GUARD), F32),   # h1 lane-shift pad
                pltpu.VMEM((9 * C1, ROWSP), F32),               # conv2 im2col
                pltpu.VMEM((PB, C2 * NCLS), F32),               # prefetched Linear weight
                pltpu.SemaphoreType.DMA((1,)),
            ],
        ),
        compiler_params=pltpu.CompilerParams(dimension_semantics=("arbitrary",)),
        cost_estimate=pl.CostEstimate(flops=flops, transcendentals=32,
                                      bytes_accessed=bytes_accessed),
    )(act_slab, lin_slab, pvec, w3v)
    return out


def reference_forward(x, w1, b1, gamma, beta, w2, b2, w3, b3):
    """Pure-JAX reference of the PyTorch module (training-mode BatchNorm)."""
    hi = jax.lax.Precision.HIGHEST
    dn = ("NCHW", "OIHW", "NCHW")
    y = jax.lax.conv_general_dilated(x, w1, (1, 1), "SAME",
                                     dimension_numbers=dn, precision=hi)
    y = y + b1[None, :, None, None]
    p = y.reshape(B, C1, PH, 2, PW, 2).mean(axis=(3, 5))
    mean = jnp.mean(p, axis=(0, 2, 3), keepdims=True)
    var = jnp.mean((p - mean) ** 2, axis=(0, 2, 3), keepdims=True)
    h1 = jnp.maximum((p - mean) / jnp.sqrt(var + EPS)
                     * gamma[None, :, None, None] + beta[None, :, None, None], 0.0)
    h2 = jax.lax.conv_general_dilated(h1, w2, (1, 1), "SAME",
                                      dimension_numbers=dn, precision=hi)
    h2 = jnp.maximum(h2 + b2[None, :, None, None], 0.0)
    logits = jnp.dot(h2.reshape(B, -1), w3.T, precision=hi) + b3
    return jax.nn.softmax(logits, axis=1)


if __name__ == "__main__":
    key = jax.random.PRNGKey(0)
    ks = jax.random.split(key, 9)
    # deterministic synthetic parameters (shapes match the PyTorch module)
    w1 = 0.30 * jax.random.normal(ks[0], (C1, 1, 3, 3), F32)       # Conv2d(1,8,3)
    b1 = 0.10 * jax.random.normal(ks[1], (C1,), F32)
    gamma = 1.0 + 0.10 * jax.random.normal(ks[2], (C1,), F32)      # BatchNorm2d(8)
    beta = 0.10 * jax.random.normal(ks[3], (C1,), F32)
    w2 = 0.10 * jax.random.normal(ks[4], (C2, C1, 3, 3), F32)      # Conv2d(8,16,3)
    b2 = 0.10 * jax.random.normal(ks[5], (C2,), F32)
    w3 = 0.02 * jax.random.normal(ks[6], (NCLS, NPIX * C2), F32)   # Linear(3136,10)
    b3 = 0.10 * jax.random.normal(ks[7], (NCLS,), F32)

    x = jax.random.normal(ks[8], (B, 1, H, W), F32)

    out = demo_forward(x, w1, b1, gamma, beta, w2, b2, w3, b3)
    out = jax.block_until_ready(out)

    assert out.shape == (B, NCLS)
    assert bool(jnp.all(jnp.abs(jnp.sum(out, axis=1) - 1.0) < 1e-3))  # softmax rows sum to 1
    ref = reference_forward(x, w1, b1, gamma, beta, w2, b2, w3, b3)
    assert bool(jnp.all(jnp.abs(out - ref) < 2e-3))                   # matches module forward
    print("KERNEL_OK")
</pallas_src>

<mosaic_0001>
module attributes {stable_mosaic.version = 11 : i64} {
  func.func @demo_kernel(%arg0: i32, %arg1: memref<32x512xf32, #tpu.memory_space<vmem>>, %arg2: memref<48x160xf32, #tpu.memory_space<vmem>>, %arg3: memref<32x16xf32, #tpu.memory_space<vmem>>, %arg4: memref<256x160xf32, #tpu.memory_space<any>>, %arg5: memref<2x10xf32, #tpu.memory_space<vmem>>, %arg6: memref<8x768xf32, #tpu.memory_space<vmem>>, %arg7: memref<72x512xf32, #tpu.memory_space<vmem>>, %arg8: memref<256x160xf32, #tpu.memory_space<vmem>>, %arg9: memref<1x!tpu.dma_semaphore, #tpu.memory_space<semaphore_mem>>) attributes {dimension_semantics = [#tpu.dimension_semantics<arbitrary>], iteration_bounds = array<i64: 1>, scalar_prefetch = 0 : i64, scratch_operands = 4 : i64, tpu.core_type = #tpu.core_type<tc>, window_params = [{pipeline_mode = #tpu.pipeline_mode<synchronous>, transform_indices = @transform_0, window_bounds = array<i64: 32, 512>}, {pipeline_mode = #tpu.pipeline_mode<synchronous>, transform_indices = @transform_1, window_bounds = array<i64: 48, 160>}, {pipeline_mode = #tpu.pipeline_mode<synchronous>, transform_indices = @transform_2, window_bounds = array<i64: 32, 16>}, {}, {pipeline_mode = #tpu.pipeline_mode<synchronous>, transform_indices = @transform_4, window_bounds = array<i64: 2, 10>}]} {
    %c0_i32 = arith.constant 0 : i32
    %0 = tpu.memref_slice %arg9[%c0_i32] : memref<1x!tpu.dma_semaphore, #tpu.memory_space<semaphore_mem>> -> memref<1x!tpu.dma_semaphore, #tpu.memory_space<semaphore_mem>>
    %1 = tpu.memref_squeeze %0 : memref<1x!tpu.dma_semaphore, #tpu.memory_space<semaphore_mem>> -> memref<!tpu.dma_semaphore, #tpu.memory_space<semaphore_mem>>
    tpu.enqueue_dma source(%arg4 : memref<256x160xf32, #tpu.memory_space<any>>) target(%arg8 : memref<256x160xf32, #tpu.memory_space<vmem>>) target_semaphore(%1 : memref<!tpu.dma_semaphore, #tpu.memory_space<semaphore_mem>>)
    %c24 = arith.constant 24 : index
    %c0 = arith.constant 0 : index
    %2 = vector.load %arg3[%c24, %c0] : memref<32x16xf32, #tpu.memory_space<vmem>>, vector<8x16xf32>
    %c0_0 = arith.constant 0 : index
    %c0_1 = arith.constant 0 : index
    %3 = vector.load %arg1[%c0_0, %c0_1] : memref<32x512xf32, #tpu.memory_space<vmem>>, vector<16x512xf32>
    %cst = arith.constant dense<0.000000e+00> : vector<8x512xf32>
    %4 = tpu.matmul %2, %3, %cst {dimension_numbers = #tpu.dot_dimension_numbers<[1], [0], [0], [1], [0, 0, 1, 1], [], []>} : vector<8x16xf32>, vector<16x512xf32>, vector<8x512xf32> -> vector<8x512xf32>
    %c0_2 = arith.constant 0 : index
    %c0_3 = arith.constant 0 : index
    %5 = vector.load %arg3[%c0_2, %c0_3] : memref<32x16xf32, #tpu.memory_space<vmem>>, vector<8x1xf32>
    %6 = vector.broadcast %5 : vector<8x1xf32> to vector<8x512xf32>
    %7 = arith.addf %4, %6 : vector<8x512xf32>
    %c25 = arith.constant 25 : index
    %c0_4 = arith.constant 0 : index
    %8 = vector.load %arg1[%c25, %c0_4] : memref<32x512xf32, #tpu.memory_space<vmem>>, vector<1x512xf32>
    %9 = vector.broadcast %8 : vector<1x512xf32> to vector<8x512xf32>
    %10 = arith.mulf %7, %9 : vector<8x512xf32>
    %cst_5 = arith.constant dense<0.000000e+00> : vector<8xf32>
    %11 = vector.multi_reduction <add>, %10, %cst_5 [1] : vector<8x512xf32> to vector<8xf32>
    %12 = vector.shape_cast %11 : vector<8xf32> to vector<8x1xf32>
    %cst_6 = arith.constant 0.00255102036 : f32
    %13 = vector.broadcast %cst_6 : f32 to vector<8x1xf32>
    %14 = arith.mulf %12, %13 : vector<8x1xf32>
    %15 = arith.mulf %10, %10 : vector<8x512xf32>
    %cst_7 = arith.constant dense<0.000000e+00> : vector<8xf32>
    %16 = vector.multi_reduction <add>, %15, %cst_7 [1] : vector<8x512xf32> to vector<8xf32>
    %17 = vector.shape_cast %16 : vector<8xf32> to vector<8x1xf32>
    %cst_8 = arith.constant 0.00255102036 : f32
    %18 = vector.broadcast %cst_8 : f32 to vector<8x1xf32>
    %19 = arith.mulf %17, %18 : vector<8x1xf32>
    %20 = arith.mulf %14, %14 : vector<8x1xf32>
    %21 = arith.subf %19, %20 : vector<8x1xf32>
    %cst_9 = arith.constant 0.000000e+00 : f32
    %22 = vector.broadcast %cst_9 : f32 to vector<8x1xf32>
    %23 = arith.maximumf %21, %22 : vector<8x1xf32>
    %24 = vector.broadcast %14 : vector<8x1xf32> to vector<8x512xf32>
    %25 = arith.subf %10, %24 : vector<8x512xf32>
    %cst_10 = arith.constant 9.99999974E-6 : f32
    %26 = vector.broadcast %cst_10 : f32 to vector<8x1xf32>
    %27 = arith.addf %23, %26 : vector<8x1xf32>
    %28 = math.rsqrt %27 : vector<8x1xf32>
    %29 = vector.broadcast %28 : vector<8x1xf32> to vector<8x512xf32>
    %30 = arith.mulf %25, %29 : vector<8x512xf32>
    %c0_11 = arith.constant 0 : index
    %c1 = arith.constant 1 : index
    %31 = vector.load %arg3[%c0_11, %c1] : memref<32x16xf32, #tpu.memory_space<vmem>>, vector<8x1xf32>
    %32 = vector.broadcast %31 : vector<8x1xf32> to vector<8x512xf32>
    %33 = arith.mulf %30, %32 : vector<8x512xf32>
    %c0_12 = arith.constant 0 : index
    %c2 = arith.constant 2 : index
    %34 = vector.load %arg3[%c0_12, %c2] : memref<32x16xf32, #tpu.memory_space<vmem>>, vector<8x1xf32>
    %35 = vector.broadcast %34 : vector<8x1xf32> to vector<8x512xf32>
    %36 = arith.addf %33, %35 : vector<8x512xf32>
    %cst_13 = arith.constant 0.000000e+00 : f32
    %37 = vector.broadcast %cst_13 : f32 to vector<8x512xf32>
    %38 = arith.maximumf %36, %37 : vector<8x512xf32>
    %cst_14 = arith.constant 0.000000e+00 : f32
    %39 = vector.broadcast %cst_14 : f32 to vector<8x128xf32>
    %c0_15 = arith.constant 0 : index
    %c0_16 = arith.constant 0 : index
    %40 = vector.load %arg6[%c0_15, %c0_16] : memref<8x768xf32, #tpu.memory_space<vmem>>, vector<8x128xf32>
    tpu.vector_store %arg6[%c0_15, %c0_16], %39 {strides = array<i32>} : memref<8x768xf32, #tpu.memory_space<vmem>>, vector<8x128xf32>,
    %cst_17 = arith.constant 0.000000e+00 : f32
    %41 = vector.broadcast %cst_17 : f32 to vector<8x128xf32>
    %c0_18 = arith.constant 0 : index
    %c640 = arith.constant 640 : index
    %42 = vector.load %arg6[%c0_18, %c640] : memref<8x768xf32, #tpu.memory_space<vmem>>, vector<8x128xf32>
    tpu.vector_store %arg6[%c0_18, %c640], %41 {strides = array<i32>} : memref<8x768xf32, #tpu.memory_space<vmem>>, vector<8x128xf32>,
    %c0_19 = arith.constant 0 : index
    %c128 = arith.constant 128 : index
    %43 = vector.load %arg6[%c0_19, %c128] : memref<8x768xf32, #tpu.memory_space<vmem>>, vector<8x512xf32>
    tpu.vector_store %arg6[%c0_19, %c128], %38 {strides = array<i32>} : memref<8x768xf32, #tpu.memory_space<vmem>>, vector<8x512xf32>,
    %c0_20 = arith.constant 0 : index
    %c113 = arith.constant 113 : index
    %44 = vector.load %arg6[%c0_20, %c113] : memref<8x768xf32, #tpu.memory_space<vmem>>, vector<8x512xf32>
    %c16 = arith.constant 16 : index
    %c0_21 = arith.constant 0 : index
    %45 = vector.load %arg1[%c16, %c0_21] : memref<32x512xf32, #tpu.memory_space<vmem>>, vector<1x512xf32>
    %46 = vector.broadcast %45 : vector<1x512xf32> to vector<8x512xf32>
    %47 = arith.mulf %44, %46 : vector<8x512xf32>
    %c0_22 = arith.constant 0 : index
    %c0_23 = arith.constant 0 : index
    %48 = vector.load %arg7[%c0_22, %c0_23] : memref<72x512xf32, #tpu.memory_space<vmem>>, vector<8x512xf32>
    tpu.vector_store %arg7[%c0_22, %c0_23], %47 {strides = array<i32>} : memref<72x512xf32, #tpu.memory_space<vmem>>, vector<8x512xf32>,
    %c0_24 = arith.constant 0 : index
    %c114 = arith.constant 114 : index
    %49 = vector.load %arg6[%c0_24, %c114] : memref<8x768xf32, #tpu.memory_space<vmem>>, vector<8x512xf32>
    %c17 = arith.constant 17 : index
    %c0_25 = arith.constant 0 : index
    %50 = vector.load %arg1[%c17, %c0_25] : memref<32x512xf32, #tpu.memory_space<vmem>>, vector<1x512xf32>
    %51 = vector.broadcast %50 : vector<1x512xf32> to vector<8x512xf32>
    %52 = arith.mulf %49, %51 : vector<8x512xf32>
    %c8 = arith.constant 8 : index
    %c0_26 = arith.constant 0 : index
    %53 = vector.load %arg7[%c8, %c0_26] : memref<72x512xf32, #tpu.memory_space<vmem>>, vector<8x512xf32>
    tpu.vector_store %arg7[%c8, %c0_26], %52 {strides = array<i32>} : memref<72x512xf32, #tpu.memory_space<vmem>>, vector<8x512xf32>,
    %c0_27 = arith.constant 0 : index
    %c115 = arith.constant 115 : index
    %54 = vector.load %arg6[%c0_27, %c115] : memref<8x768xf32, #tpu.memory_space<vmem>>, vector<8x512xf32>
    %c18 = arith.constant 18 : index
    %c0_28 = arith.constant 0 : index
    %55 = vector.load %arg1[%c18, %c0_28] : memref<32x512xf32, #tpu.memory_space<vmem>>, vector<1x512xf32>
    %56 = vector.broadcast %55 : vector<1x512xf32> to vector<8x512xf32>
    %57 = arith.mulf %54, %56 : vector<8x512xf32>
    %c16_29 = arith.constant 16 : index
    %c0_30 = arith.constant 0 : index
    %58 = vector.load %arg7[%c16_29, %c0_30] : memref<72x512xf32, #tpu.memory_space<vmem>>, vector<8x512xf32>
    tpu.vector_store %arg7[%c16_29, %c0_30], %57 {strides = array<i32>} : memref<72x512xf32, #tpu.memory_space<vmem>>, vector<8x512xf32>,
    %c0_31 = arith.constant 0 : index
    %c127 = arith.constant 127 : index
    %59 = vector.load %arg6[%c0_31, %c127] : memref<8x768xf32, #tpu.memory_space<vmem>>, vector<8x512xf32>
    %c19 = arith.constant 19 : index
    %c0_32 = arith.constant 0 : index
    %60 = vector.load %arg1[%c19, %c0_32] : memref<32x512xf32, #tpu.memory_space<vmem>>, vector<1x512xf32>
    %61 = vector.broadcast %60 : vector<1x512xf32> to vector<8x512xf32>
    %62 = arith.mulf %59, %61 : vector<8x512xf32>
    %c24_33 = arith.constant 24 : index
    %c0_34 = arith.constant 0 : index
    %63 = vector.load %arg7[%c24_33, %c0_34] : memref<72x512xf32, #tpu.memory_space<vmem>>, vector<8x512xf32>
    tpu.vector_store %arg7[%c24_33, %c0_34], %62 {strides = array<i32>} : memref<72x512xf32, #tpu.memory_space<vmem>>, vector<8x512xf32>,
    %c0_35 = arith.constant 0 : index
    %c128_36 = arith.constant 128 : index
    %64 = vector.load %arg6[%c0_35, %c128_36] : memref<8x768xf32, #tpu.memory_space<vmem>>, vector<8x512xf32>
    %c20 = arith.constant 20 : index
    %c0_37 = arith.constant 0 : index
    %65 = vector.load %arg1[%c20, %c0_37] : memref<32x512xf32, #tpu.memory_space<vmem>>, vector<1x512xf32>
    %66 = vector.broadcast %65 : vector<1x512xf32> to vector<8x512xf32>
    %67 = arith.mulf %64, %66 : vector<8x512xf32>
    %c32 = arith.constant 32 : index
    %c0_38 = arith.constant 0 : index
    %68 = vector.load %arg7[%c32, %c0_38] : memref<72x512xf32, #tpu.memory_space<vmem>>, vector<8x512xf32>
    tpu.vector_store %arg7[%c32, %c0_38], %67 {strides = array<i32>} : memref<72x512xf32, #tpu.memory_space<vmem>>, vector<8x512xf32>,
    %c0_39 = arith.constant 0 : index
    %c129 = arith.constant 129 : index
    %69 = vector.load %arg6[%c0_39, %c129] : memref<8x768xf32, #tpu.memory_space<vmem>>, vector<8x512xf32>
    %c21 = arith.constant 21 : index
    %c0_40 = arith.constant 0 : index
    %70 = vector.load %arg1[%c21, %c0_40] : memref<32x512xf32, #tpu.memory_space<vmem>>, vector<1x512xf32>
    %71 = vector.broadcast %70 : vector<1x512xf32> to vector<8x512xf32>
    %72 = arith.mulf %69, %71 : vector<8x512xf32>
    %c40 = arith.constant 40 : index
    %c0_41 = arith.constant 0 : index
    %73 = vector.load %arg7[%c40, %c0_41] : memref<72x512xf32, #tpu.memory_space<vmem>>, vector<8x512xf32>
    tpu.vector_store %arg7[%c40, %c0_41], %72 {strides = array<i32>} : memref<72x512xf32, #tpu.memory_space<vmem>>, vector<8x512xf32>,
    %c0_42 = arith.constant 0 : index
    %c141 = arith.constant 141 : index
    %74 = vector.load %arg6[%c0_42, %c141] : memref<8x768xf32, #tpu.memory_space<vmem>>, vector<8x512xf32>
    %c22 = arith.constant 22 : index
    %c0_43 = arith.constant 0 : index
    %75 = vector.load %arg1[%c22, %c0_43] : memref<32x512xf32, #tpu.memory_space<vmem>>, vector<1x512xf32>
    %76 = vector.broadcast %75 : vector<1x512xf32> to vector<8x512xf32>
    %77 = arith.mulf %74, %76 : vector<8x512xf32>
    %c48 = arith.constant 48 : index
    %c0_44 = arith.constant 0 : index
    %78 = vector.load %arg7[%c48, %c0_44] : memref<72x512xf32, #tpu.memory_space<vmem>>, vector<8x512xf32>
    tpu.vector_store %arg7[%c48, %c0_44], %77 {strides = array<i32>} : memref<72x512xf32, #tpu.memory_space<vmem>>, vector<8x512xf32>,
    %c0_45 = arith.constant 0 : index
    %c142 = arith.constant 142 : index
    %79 = vector.load %arg6[%c0_45, %c142] : memref<8x768xf32, #tpu.memory_space<vmem>>, vector<8x512xf32>
    %c23 = arith.constant 23 : index
    %c0_46 = arith.constant 0 : index
    %80 = vector.load %arg1[%c23, %c0_46] : memref<32x512xf32, #tpu.memory_space<vmem>>, vector<1x512xf32>
    %81 = vector.broadcast %80 : vector<1x512xf32> to vector<8x512xf32>
    %82 = arith.mulf %79, %81 : vector<8x512xf32>
    %c56 = arith.constant 56 : index
    %c0_47 = arith.constant 0 : index
    %83 = vector.load %arg7[%c56, %c0_47] : memref<72x512xf32, #tpu.memory_space<vmem>>, vector<8x512xf32>
    tpu.vector_store %arg7[%c56, %c0_47], %82 {strides = array<i32>} : memref<72x512xf32, #tpu.memory_space<vmem>>, vector<8x512xf32>,
    %c0_48 = arith.constant 0 : index
    %c143 = arith.constant 143 : index
    %84 = vector.load %arg6[%c0_48, %c143] : memref<8x768xf32, #tpu.memory_space<vmem>>, vector<8x512xf32>
    %c24_49 = arith.constant 24 : index
    %c0_50 = arith.constant 0 : index
    %85 = vector.load %arg1[%c24_49, %c0_50] : memref<32x512xf32, #tpu.memory_space<vmem>>, vector<1x512xf32>
    %86 = vector.broadcast %85 : vector<1x512xf32> to vector<8x512xf32>
    %87 = arith.mulf %84, %86 : vector<8x512xf32>
    %c64 = arith.constant 64 : index
    %c0_51 = arith.constant 0 : index
    %88 = vector.load %arg7[%c64, %c0_51] : memref<72x512xf32, #tpu.memory_space<vmem>>, vector<8x512xf32>
    tpu.vector_store %arg7[%c64, %c0_51], %87 {strides = array<i32>} : memref<72x512xf32, #tpu.memory_space<vmem>>, vector<8x512xf32>,
    %c32_52 = arith.constant 32 : index
    %c0_53 = arith.constant 0 : index
    %89 = vector.load %arg2[%c32_52, %c0_53] : memref<48x160xf32, #tpu.memory_space<vmem>>, vector<16x72xf32>
    %c0_54 = arith.constant 0 : index
    %c0_55 = arith.constant 0 : index
    %90 = vector.load %arg7[%c0_54, %c0_55] : memref<72x512xf32, #tpu.memory_space<vmem>>, vector<72x512xf32>
    %cst_56 = arith.constant dense<0.000000e+00> : vector<16x512xf32>
    %91 = tpu.matmul %89, %90, %cst_56 {dimension_numbers = #tpu.dot_dimension_numbers<[1], [0], [0], [1], [0, 0, 1, 1], [], []>} : vector<16x72xf32>, vector<72x512xf32>, vector<16x512xf32> -> vector<16x512xf32>
    %c0_57 = arith.constant 0 : index
    %c3 = arith.constant 3 : index
    %92 = vector.load %arg3[%c0_57, %c3] : memref<32x16xf32, #tpu.memory_space<vmem>>, vector<16x1xf32>
    %93 = vector.broadcast %92 : vector<16x1xf32> to vector<16x512xf32>
    %94 = arith.addf %91, %93 : vector<16x512xf32>
    %cst_58 = arith.constant 0.000000e+00 : f32
    %95 = vector.broadcast %cst_58 : f32 to vector<16x512xf32>
    %96 = arith.maximumf %94, %95 : vector<16x512xf32>
    %c0_i32_59 = arith.constant 0 : i32
    %97 = tpu.memref_slice %arg9[%c0_i32_59] : memref<1x!tpu.dma_semaphore, #tpu.memory_space<semaphore_mem>> -> memref<1x!tpu.dma_semaphore, #tpu.memory_space<semaphore_mem>>
    %98 = tpu.memref_squeeze %97 : memref<1x!tpu.dma_semaphore, #tpu.memory_space<semaphore_mem>> -> memref<!tpu.dma_semaphore, #tpu.memory_space<semaphore_mem>>
    tpu.wait_dma2 semaphore(%98 : memref<!tpu.dma_semaphore, #tpu.memory_space<semaphore_mem>>) src(%arg4 : memref<256x160xf32, #tpu.memory_space<any>>) dst(%arg8 : memref<256x160xf32, #tpu.memory_space<vmem>>)
    %c0_60 = arith.constant 0 : index
    %c0_61 = arith.constant 0 : index
    %99 = vector.load %arg2[%c0_60, %c0_61] : memref<48x160xf32, #tpu.memory_space<vmem>>, vector<16x160xf32>
    %c16_62 = arith.constant 16 : index
    %c0_63 = arith.constant 0 : index
    %100 = vector.load %arg2[%c16_62, %c0_63] : memref<48x160xf32, #tpu.memory_space<vmem>>, vector<10x160xf32>
    %c16_64 = arith.constant 16 : index
    %c0_65 = arith.constant 0 : index
    %101 = vector.load %arg3[%c16_64, %c0_65] : memref<32x16xf32, #tpu.memory_space<vmem>>, vector<1x10xf32>
    %c0_66 = arith.constant 0 : index
    %c0_67 = arith.constant 0 : index
    %102 = vector.load %arg8[%c0_66, %c0_67] : memref<256x160xf32, #tpu.memory_space<vmem>>, vector<256x160xf32>
    %103 = vector.extract_strided_slice %96 {offsets = [0, 0], sizes = [16, 256], strides = [1, 1]} : vector<16x512xf32> to vector<16x256xf32>
    %cst_68 = arith.constant dense<0.000000e+00> : vector<16x160xf32>
    %104 = tpu.matmul %103, %102, %cst_68 {dimension_numbers = #tpu.dot_dimension_numbers<[1], [0], [0], [1], [0, 0, 1, 1], [], []>} : vector<16x256xf32>, vector<256x160xf32>, vector<16x160xf32> -> vector<16x160xf32>
    %105 = arith.mulf %104, %99 : vector<16x160xf32>
    %cst_69 = arith.constant dense<0.000000e+00> : vector<16x10xf32>
    %106 = tpu.matmul %105, %100, %cst_69 {dimension_numbers = #tpu.dot_dimension_numbers<[1], [1], [0], [0], [0, 0, 1, 0], [], []>} : vector<16x160xf32>, vector<10x160xf32>, vector<16x10xf32> -> vector<16x10xf32>
    %cst_70 = arith.constant dense<0.000000e+00> : vector<10xf32>
    %107 = vector.multi_reduction <add>, %106, %cst_70 [0] : vector<16x10xf32> to vector<10xf32>
    %108 = vector.shape_cast %107 : vector<10xf32> to vector<1x10xf32>
    %109 = arith.addf %108, %101 : vector<1x10xf32>
    %cst_71 = arith.constant dense<0xFF800000> : vector<1xf32>
    %110 = vector.multi_reduction <maximumf>, %109, %cst_71 [1] : vector<1x10xf32> to vector<1xf32>
    %111 = vector.shape_cast %110 : vector<1xf32> to vector<1x1xf32>
    %112 = vector.broadcast %111 : vector<1x1xf32> to vector<1x10xf32>
    %113 = arith.subf %109, %112 : vector<1x10xf32>
    %114 = math.exp %113 : vector<1x10xf32>
    %cst_72 = arith.constant dense<0.000000e+00> : vector<1xf32>
    %115 = vector.multi_reduction <add>, %114, %cst_72 [1] : vector<1x10xf32> to vector<1xf32>
    %116 = vector.shape_cast %115 : vector<1xf32> to vector<1x1xf32>
    %117 = vector.broadcast %116 : vector<1x1xf32> to vector<1x10xf32>
    %118 = arith.divf %114, %117 : vector<1x10xf32>
    %c0_73 = arith.constant 0 : index
    %c0_74 = arith.constant 0 : index
    %119 = vector.load %arg5[%c0_73, %c0_74] : memref<2x10xf32, #tpu.memory_space<vmem>>, vector<1x10xf32>
    tpu.vector_store %arg5[%c0_73, %c0_74], %118 {strides = array<i32>} : memref<2x10xf32, #tpu.memory_space<vmem>>, vector<1x10xf32>,
    %120 = vector.extract_strided_slice %96 {offsets = [0, 256], sizes = [16, 256], strides = [1, 1]} : vector<16x512xf32> to vector<16x256xf32>
    %cst_75 = arith.constant dense<0.000000e+00> : vector<16x160xf32>
    %121 = tpu.matmul %120, %102, %cst_75 {dimension_numbers = #tpu.dot_dimension_numbers<[1], [0], [0], [1], [0, 0, 1, 1], [], []>} : vector<16x256xf32>, vector<256x160xf32>, vector<16x160xf32> -> vector<16x160xf32>
    %122 = arith.mulf %121, %99 : vector<16x160xf32>
    %cst_76 = arith.constant dense<0.000000e+00> : vector<16x10xf32>
    %123 = tpu.matmul %122, %100, %cst_76 {dimension_numbers = #tpu.dot_dimension_numbers<[1], [1], [0], [0], [0, 0, 1, 0], [], []>} : vector<16x160xf32>, vector<10x160xf32>, vector<16x10xf32> -> vector<16x10xf32>
    %cst_77 = arith.constant dense<0.000000e+00> : vector<10xf32>
    %124 = vector.multi_reduction <add>, %123, %cst_77 [0] : vector<16x10xf32> to vector<10xf32>
    %125 = vector.shape_cast %124 : vector<10xf32> to vector<1x10xf32>
    %126 = arith.addf %125, %101 : vector<1x10xf32>
    %cst_78 = arith.constant dense<0xFF800000> : vector<1xf32>
    %127 = vector.multi_reduction <maximumf>, %126, %cst_78 [1] : vector<1x10xf32> to vector<1xf32>
    %128 = vector.shape_cast %127 : vector<1xf32> to vector<1x1xf32>
    %129 = vector.broadcast %128 : vector<1x1xf32> to vector<1x10xf32>
    %130 = arith.subf %126, %129 : vector<1x10xf32>
    %131 = math.exp %130 : vector<1x10xf32>
    %cst_79 = arith.constant dense<0.000000e+00> : vector<1xf32>
    %132 = vector.multi_reduction <add>, %131, %cst_79 [1] : vector<1x10xf32> to vector<1xf32>
    %133 = vector.shape_cast %132 : vector<1xf32> to vector<1x1xf32>
    %134 = vector.broadcast %133 : vector<1x1xf32> to vector<1x10xf32>
    %135 = arith.divf %131, %134 : vector<1x10xf32>
    %c1_80 = arith.constant 1 : index
    %c0_81 = arith.constant 0 : index
    %136 = vector.load %arg5[%c1_80, %c0_81] : memref<2x10xf32, #tpu.memory_space<vmem>>, vector<1x10xf32>
    tpu.vector_store %arg5[%c1_80, %c0_81], %135 {strides = array<i32>} : memref<2x10xf32, #tpu.memory_space<vmem>>, vector<1x10xf32>,
    return
  }
  func.func @transform_0(%arg0: i32) -> (i32, i32) {
    %c0_i32 = arith.constant 0 : i32
    %c0_i32_0 = arith.constant 0 : i32
    %c0_i32_1 = arith.constant 0 : i32
    return %c0_i32, %c0_i32_0 : i32, i32
  }
  func.func @transform_1(%arg0: i32) -> (i32, i32) {
    %c0_i32 = arith.constant 0 : i32
    %c0_i32_0 = arith.constant 0 : i32
    %c0_i32_1 = arith.constant 0 : i32
    return %c0_i32, %c0_i32_0 : i32, i32
  }
  func.func @transform_2(%arg0: i32) -> (i32, i32) {
    %c0_i32 = arith.constant 0 : i32
    %c0_i32_0 = arith.constant 0 : i32
    %c0_i32_1 = arith.constant 0 : i32
    return %c0_i32, %c0_i32_0 : i32, i32
  }
  func.func @transform_4(%arg0: i32) -> (i32, i32) {
    %c0_i32 = arith.constant 0 : i32
    %c0_i32_0 = arith.constant 0 : i32
    %c0_i32_1 = arith.constant 0 : i32
    return %c0_i32, %c0_i32_0 : i32, i32
  }
}

</mosaic_0001>

<llo_original>
// kernel: demo_forward.1
$region0: #{demo_forward.1}
  #allocation0 [shape = 'u32[]', space=smem, size = 0x4, offset = 0x4, fixed_abs, tag = 'smem constant byte address 0x4 - core index']
  #allocation1 [shape = 'u32[144,128]{1,0:T(1,128)}', space=vmem, size = 0x12000, scoped, tag = 'internal scratch']
  #allocation2 [shape = 'f32[8,768]{1,0:T(8,128)}', space=vmem, size = 0x6000, scoped, tag = 'scratch operand']
  #allocation3 [shape = 'f32[72,512]{1,0:T(8,128)}', space=vmem, size = 0x24000, scoped, tag = 'scratch operand']
  #allocation4 [shape = 'f32[256,160]{1,0:T(8,128)}', space=vmem, size = 0x40000, scoped, tag = 'scratch operand']
  #allocation5 [shape = 's32[1]{0}', space=sflag, size = 0x4, scoped, tag = 'scratch operand']
  #allocation8 [shape = 's32[]', space=sflag, size = 0x4, offset = 0, fixed_abs, tag = 'sflag constant byte address 0x0 - dummy sync flag']
  %s0 = inlined_call_operand.vmem [shape: f32[32,512], index: 0, kind: input, shape index: {}]
  %s1 = inlined_call_operand.vmem [shape: f32[48,160], index: 1, kind: input, shape index: {}]
  %s2 = inlined_call_operand.vmem [shape: f32[32,16], index: 2, kind: input, shape index: {}]
  %s3 = inlined_call_operand.vmem [shape: f32[256,160], index: 3, kind: input, shape index: {}]
  %s4 = inlined_call_operand.hbm [shape: f32[2,10], index: 4, kind: output, shape index: {}]
  %s5 = sld [smem:[#allocation0]]
  $region56: #{demo_forward.1} parent=0
    _
  %s7 = ssub.s32 1, %s5
  %s8 = scalar_select 0, %s7, %s5
  $region1: #{demo_forward.1} parent=0
    #allocation6 [shape = 'u8[1024]{0}', space=vmem, size = 0x400, scoped, tag = 'output window, operand 0, single buffered']
    #allocation7 [shape = 's32[1]{0}', space=sflag, size = 0x4, scoped, tag = 'scoped memory for demo_forward.1']
    %9 = vsyncpa [#allocation7], 0
    // Predicated region
    $region2: #{demo_forward.1} parent=1 // pred_check
      _
    $region3: #{demo_forward.1} parent=1 // pred_check_branch
      %11 = sbr.rel (0) target = $region5
    $region4: #{demo_forward.1} parent=1 // pred_region
      _
    $region5: #{demo_forward.1} parent=1 // pred_fallthru
      _
    // Predicated region
    $region6: #{demo_forward.1} parent=1 // pred_check
      _
    $region7: #{demo_forward.1} parent=1 // pred_check_branch
      %13 = sbr.rel (0) target = $region9
    $region8: #{demo_forward.1} parent=1 // pred_region
      _
    $region9: #{demo_forward.1} parent=1 // pred_fallthru
      _
    // Predicated region
    $region10: #{demo_forward.1} parent=1 // pred_check
      _
    $region11: #{demo_forward.1} parent=1 // pred_check_branch
      %15 = sbr.rel (0) target = $region13
    $region12: #{demo_forward.1} parent=1 // pred_region
      _
    $region13: #{demo_forward.1} parent=1 // pred_fallthru
      _
    %p17 = scmp.lt.u32.totalorder 512, 8
    %p18 = pneg %p17
    // Predicated region
    $region14: #{demo_forward.1} parent=1 // pred_check
      _
    $region15: #{demo_forward.1} parent=1 // pred_check_branch
      %20 = sbr.rel (%p17) target = $region17
    $region16: #{demo_forward.1} parent=1 // pred_region
      %s35 = sand.u32 512, 7
      %p36 = scmp.eq.s32.totalorder %s35, 0
      // Predicated region
      $region29: #{demo_forward.1} parent=16 // pred_check
        %p37 = pneg %p36
      $region30: #{demo_forward.1} parent=16 // pred_check_branch
        %39 = sbr.rel (%p37) target = $region32
      $region31: #{demo_forward.1} parent=16 // pred_region
        loop: start=0, step=1, limit=1
        $region33: #{demo_forward.1} parent=31 // loop_pre_header
          _
        $region34: #{demo_forward.1} parent=31 // loop_header
          %s41 = sphi 0, %s45
          %p42 = scmp.ge.s32.totalorder %s41, 1
          %s46 = sphi %s3, %s3
          %s47 = sphi [#allocation4], [#allocation4]
        $region35: #{demo_forward.1} parent=31 // loop_header_branch
          %44 = sbr.rel (%p42) target = $region39
        $region36: #{demo_forward.1} parent=31 // loop_body
          %v48 = vld [vmem:[%s46] sm:$0xff]
          %49 = vst [vmem:[%s47] sm:$0xff] %v48
          %v50 = vld [vmem:[%s46 + $0x8] sm:$0xff]
          %51 = vst [vmem:[%s47 + $0x8] sm:$0xff] %v50
          %v52 = vld [vmem:[%s46 + $0x10] sm:$0xff]
          %53 = vst [vmem:[%s47 + $0x10] sm:$0xff] %v52
          %v54 = vld [vmem:[%s46 + $0x18] sm:$0xff]
          %55 = vst [vmem:[%s47 + $0x18] sm:$0xff] %v54
          %v56 = vld [vmem:[%s46 + $0x20] sm:$0xff]
          %57 = vst [vmem:[%s47 + $0x20] sm:$0xff] %v56
          %v58 = vld [vmem:[%s46 + $0x28] sm:$0xff]
          %59 = vst [vmem:[%s47 + $0x28] sm:$0xff] %v58
          %v60 = vld [vmem:[%s46 + $0x30] sm:$0xff]
          %61 = vst [vmem:[%s47 + $0x30] sm:$0xff] %v60
          %v62 = vld [vmem:[%s46 + $0x38] sm:$0xff]
          %63 = vst [vmem:[%s47 + $0x38] sm:$0xff] %v62
          %v64 = vld [vmem:[%s46 + $0x40] sm:$0xff]
          %65 = vst [vmem:[%s47 + $0x40] sm:$0xff] %v64
          %v66 = vld [vmem:[%s46 + $0x48] sm:$0xff]
          %67 = vst [vmem:[%s47 + $0x48] sm:$0xff] %v66
          %v68 = vld [vmem:[%s46 + $0x50] sm:$0xff]
          %69 = vst [vmem:[%s47 + $0x50] sm:$0xff] %v68
          %v70 = vld [vmem:[%s46 + $0x58] sm:$0xff]
          %71 = vst [vmem:[%s47 + $0x58] sm:$0xff] %v70
          %v72 = vld [vmem:[%s46 + $0x60] sm:$0xff]
          %73 = vst [vmem:[%s47 + $0x60] sm:$0xff] %v72
          %v74 = vld [vmem:[%s46 + $0x68] sm:$0xff]
          %75 = vst [vmem:[%s47 + $0x68] sm:$0xff] %v74
          %v76 = vld [vmem:[%s46 + $0x70] sm:$0xff]
          %77 = vst [vmem:[%s47 + $0x70] sm:$0xff] %v76
          %v78 = vld [vmem:[%s46 + $0x78] sm:$0xff]
          %79 = vst [vmem:[%s47 + $0x78] sm:$0xff] %v78
          %v80 = vld [vmem:[%s46 + $0x80] sm:$0xff]
          %81 = vst [vmem:[%s47 + $0x80] sm:$0xff] %v80
          %v82 = vld [vmem:[%s46 + $0x88] sm:$0xff]
          %83 = vst [vmem:[%s47 + $0x88] sm:$0xff] %v82
          %v84 = vld [vmem:[%s46 + $0x90] sm:$0xff]
          %85 = vst [vmem:[%s47 + $0x90] sm:$0xff] %v84
          %v86 = vld [vmem:[%s46 + $0x98] sm:$0xff]
          %87 = vst [vmem:[%s47 + $0x98] sm:$0xff] %v86
          %v88 = vld [vmem:[%s46 + $0xa0] sm:$0xff]
          %89 = vst [vmem:[%s47 + $0xa0] sm:$0xff] %v88
          %v90 = vld [vmem:[%s46 + $0xa8] sm:$0xff]
          %91 = vst [vmem:[%s47 + $0xa8] sm:$0xff] %v90
          %v92 = vld [vmem:[%s46 + $0xb0] sm:$0xff]
          %93 = vst [vmem:[%s47 + $0xb0] sm:$0xff] %v92
          %v94 = vld [vmem:[%s46 + $0xb8] sm:$0xff]
          %95 = vst [vmem:[%s47 + $0xb8] sm:$0xff] %v94
          %v96 = vld [vmem:[%s46 + $0xc0] sm:$0xff]
          %97 = vst [vmem:[%s47 + $0xc0] sm:$0xff] %v96
          %v98 = vld [vmem:[%s46 + $0xc8] sm:$0xff]
          %99 = vst [vmem:[%s47 + $0xc8] sm:$0xff] %v98
          %v100 = vld [vmem:[%s46 + $0xd0] sm:$0xff]
          %101 = vst [vmem:[%s47 + $0xd0] sm:$0xff] %v100
          %v102 = vld [vmem:[%s46 + $0xd8] sm:$0xff]
          %103 = vst [vmem:[%s47 + $0xd8] sm:$0xff] %v102
          %v104 = vld [vmem:[%s46 + $0xe0] sm:$0xff]
          %105 = vst [vmem:[%s47 + $0xe0] sm:$0xff] %v104
          %v106 = vld [vmem:[%s46 + $0xe8] sm:$0xff]
          %107 = vst [vmem:[%s47 + $0xe8] sm:$0xff] %v106
          %v108 = vld [vmem:[%s46 + $0xf0] sm:$0xff]
          %109 = vst [vmem:[%s47 + $0xf0] sm:$0xff] %v108
          %v110 = vld [vmem:[%s46 + $0xf8] sm:$0xff]
          %111 = vst [vmem:[%s47 + $0xf8] sm:$0xff] %v110
          %v112 = vld [vmem:[%s46 + $0x100] sm:$0xff]
          %113 = vst [vmem:[%s47 + $0x100] sm:$0xff] %v112
          %v114 = vld [vmem:[%s46 + $0x108] sm:$0xff]
          %115 = vst [vmem:[%s47 + $0x108] sm:$0xff] %v114
          %v116 = vld [vmem:[%s46 + $0x110] sm:$0xff]
          %117 = vst [vmem:[%s47 + $0x110] sm:$0xff] %v116
          %v118 = vld [vmem:[%s46 + $0x118] sm:$0xff]
          %119 = vst [vmem:[%s47 + $0x118] sm:$0xff] %v118
          %v120 = vld [vmem:[%s46 + $0x120] sm:$0xff]
          %121 = vst [vmem:[%s47 + $0x120] sm:$0xff] %v120
          %v122 = vld [vmem:[%s46 + $0x128] sm:$0xff]
          %123 = vst [vmem:[%s47 + $0x128] sm:$0xff] %v122
          %v124 = vld [vmem:[%s46 + $0x130] sm:$0xff]
          %125 = vst [vmem:[%s47 + $0x130] sm:$0xff] %v124
          %v126 = vld [vmem:[%s46 + $0x138] sm:$0xff]
          %127 = vst [vmem:[%s47 + $0x138] sm:$0xff] %v126
          %v128 = vld [vmem:[%s46 + $0x140] sm:$0xff]
          %129 = vst [vmem:[%s47 + $0x140] sm:$0xff] %v128
          %v130 = vld [vmem:[%s46 + $0x148] sm:$0xff]
          %131 = vst [vmem:[%s47 + $0x148] sm:$0xff] %v130
          %v132 = vld [vmem:[%s46 + $0x150] sm:$0xff]
          %133 = vst [vmem:[%s47 + $0x150] sm:$0xff] %v132
          %v134 = vld [vmem:[%s46 + $0x158] sm:$0xff]
          %135 = vst [vmem:[%s47 + $0x158] sm:$0xff] %v134
          %v136 = vld [vmem:[%s46 + $0x160] sm:$0xff]
          %137 = vst [vmem:[%s47 + $0x160] sm:$0xff] %v136
          %v138 = vld [vmem:[%s46 + $0x168] sm:$0xff]
          %139 = vst [vmem:[%s47 + $0x168] sm:$0xff] %v138
          %v140 = vld [vmem:[%s46 + $0x170] sm:$0xff]
          %141 = vst [vmem:[%s47 + $0x170] sm:$0xff] %v140
          %v142 = vld [vmem:[%s46 + $0x178] sm:$0xff]
          %143 = vst [vmem:[%s47 + $0x178] sm:$0xff] %v142
          %v144 = vld [vmem:[%s46 + $0x180] sm:$0xff]
          %145 = vst [vmem:[%s47 + $0x180] sm:$0xff] %v144
          %v146 = vld [vmem:[%s46 + $0x188] sm:$0xff]
          %147 = vst [vmem:[%s47 + $0x188] sm:$0xff] %v146
          %v148 = vld [vmem:[%s46 + $0x190] sm:$0xff]
          %149 = vst [vmem:[%s47 + $0x190] sm:$0xff] %v148
          %v150 = vld [vmem:[%s46 + $0x198] sm:$0xff]
          %151 = vst [vmem:[%s47 + $0x198] sm:$0xff] %v150
          %v152 = vld [vmem:[%s46 + $0x1a0] sm:$0xff]
          %153 = vst [vmem:[%s47 + $0x1a0] sm:$0xff] %v152
          %v154 = vld [vmem:[%s46 + $0x1a8] sm:$0xff]
          %155 = vst [vmem:[%s47 + $0x1a8] sm:$0xff] %v154
          %v156 = vld [vmem:[%s46 + $0x1b0] sm:$0xff]
          %157 = vst [vmem:[%s47 + $0x1b0] sm:$0xff] %v156
          %v158 = vld [vmem:[%s46 + $0x1b8] sm:$0xff]
          %159 = vst [vmem:[%s47 + $0x1b8] sm:$0xff] %v158
          %v160 = vld [vmem:[%s46 + $0x1c0] sm:$0xff]
          %161 = vst [vmem:[%s47 + $0x1c0] sm:$0xff] %v160
          %v162 = vld [vmem:[%s46 + $0x1c8] sm:$0xff]
          %163 = vst [vmem:[%s47 + $0x1c8] sm:$0xff] %v162
          %v164 = vld [vmem:[%s46 + $0x1d0] sm:$0xff]
          %165 = vst [vmem:[%s47 + $0x1d0] sm:$0xff] %v164
          %v166 = vld [vmem:[%s46 + $0x1d8] sm:$0xff]
          %167 = vst [vmem:[%s47 + $0x1d8] sm:$0xff] %v166
          %v168 = vld [vmem:[%s46 + $0x1e0] sm:$0xff]
          %169 = vst [vmem:[%s47 + $0x1e0] sm:$0xff] %v168
          %v170 = vld [vmem:[%s46 + $0x1e8] sm:$0xff]
          %171 = vst [vmem:[%s47 + $0x1e8] sm:$0xff] %v170
          %v172 = vld [vmem:[%s46 + $0x1f0] sm:$0xff]
          %173 = vst [vmem:[%s47 + $0x1f0] sm:$0xff] %v172
          %v174 = vld [vmem:[%s46 + $0x1f8] sm:$0xff]
          %175 = vst [vmem:[%s47 + $0x1f8] sm:$0xff] %v174
        $region37: #{demo_forward.1} parent=31 // loop_footer
          %s45 = sadd.s32 1, %s41
        $region38: #{demo_forward.1} parent=31 // loop_footer_branch
          %40 = sbr.rel target = $region34
        $region39: #{demo_forward.1} parent=31 // loop_exit
          _
      $region32: #{demo_forward.1} parent=16 // pred_fallthru
        _
      %p176 = pneg %p36
      // Predicated region
      $region40: #{demo_forward.1} parent=16 // pred_check
        _
      $region41: #{demo_forward.1} parent=16 // pred_check_branch
        %178 = sbr.rel (%p36) target = $region43
      $region42: #{demo_forward.1} parent=16 // pred_region
        %s179 = sand.u32 512, 7
      $region43: #{demo_forward.1} parent=16 // pred_fallthru
        _
    $region17: #{demo_forward.1} parent=1 // pred_fallthru
      _
    // Predicated region
    $region18: #{demo_forward.1} parent=1 // pred_check
      %p21 = pneg %p17
    $region19: #{demo_forward.1} parent=1 // pred_check_branch
      %23 = sbr.rel (%p21) target = $region21
    $region20: #{demo_forward.1} parent=1 // pred_region
      %s24 = sshllo.u32 0, 512
      loop: start=0, step=1, limit=1
      $region22: #{demo_forward.1} parent=20 // loop_pre_header
        _
      $region23: #{demo_forward.1} parent=20 // loop_header
        %s26 = sphi 0, %s30
        %p27 = scmp.ge.s32.totalorder %s26, 1
        %s31 = sphi %s3, %s3
        %s32 = sphi [#allocation4], [#allocation4]
      $region24: #{demo_forward.1} parent=20 // loop_header_branch
        %29 = sbr.rel (%p27) target = $region28
      $region25: #{demo_forward.1} parent=20 // loop_body
        %v33 = vld [vmem:[%s31] sm:%s24]
        %34 = vst [vmem:[%s32] sm:%s24] %v33
      $region26: #{demo_forward.1} parent=20 // loop_footer
        %s30 = sadd.s32 1, %s26
      $region27: #{demo_forward.1} parent=20 // loop_footer_branch
        %25 = sbr.rel target = $region23
      $region28: #{demo_forward.1} parent=20 // loop_exit
        _
    $region21: #{demo_forward.1} parent=1 // pred_fallthru
      _
    // Predicated region
    $region44: #{demo_forward.1} parent=1 // pred_check
      _
    $region45: #{demo_forward.1} parent=1 // pred_check_branch
      %182 = sbr.rel (0) target = $region47
    $region46: #{demo_forward.1} parent=1 // pred_region
      %183 = vsyncadd [#allocation5], 8192
    $region47: #{demo_forward.1} parent=1 // pred_fallthru
      _
    %v184 = vld [vmem:[%s2 + $0x18] sm:$0xff]
    %v185 = vld [vmem:[%s0] sm:$0xff]
    %v186 = vld [vmem:[%s0 + $0x8] sm:$0xff]
    %v187 = vld [vmem:[%s0 + $0x10] sm:$0xff]
    %v188 = vld [vmem:[%s0 + $0x18] sm:$0xff]
    %v189 = vld [vmem:[%s0 + $0x20] sm:$0xff]
    %v190 = vld [vmem:[%s0 + $0x28] sm:$0xff]
    %v191 = vld [vmem:[%s0 + $0x30] sm:$0xff]
    %v192 = vld [vmem:[%s0 + $0x38] sm:$0xff]
    %v193 = vld [vmem:[%s2] sm:$0xff]
    %195 = vset.pattern.permute.xlu0 0
    %196 = vperm.xlu0 %195, %v193
    %v197 = vpop.permute.xlu0 %196
    %vm199 = vcmask 130048
    %v201 = vsel %vm199, %v184, 0
    %203 = vmatprep.subr.mxu0 %v186
    %204 = vmatpush1.msra.mxu0 %v185
    %205 = vmatprep.subr.mxu0 %v190
    %206 = vmatpush1.msra.mxu0 %v189
    %207 = vmatprep.subr.mxu0 0.0
    %208 = vmatpush1.msra.mxu0 0.0
    %209 = vmatprep.subr.mxu0 0.0
    %210 = vmatpush1.msra.mxu0 0.0
    %211 = vmatprep.subr.mxu0 0.0
    %212 = vmatpush1.msra.mxu0 0.0
    %213 = vmatprep.subr.mxu0 0.0
    %214 = vmatpush1.msra.mxu0 0.0
    %215 = vmatprep.subr.mxu0 0.0
    %216 = vmatpush1.msra.mxu0 0.0
    %217 = vmatprep.subr.mxu0 0.0
    %218 = vmatpush1.msra.mxu0 0.0
    %219 = vmatprep.subr.mxu0 0.0
    %220 = vmatpush1.msra.mxu0 0.0
    %221 = vmatprep.subr.mxu0 0.0
    %222 = vmatpush1.msra.mxu0 0.0
    %223 = vmatprep.subr.mxu0 0.0
    %224 = vmatpush1.msra.mxu0 0.0
    %225 = vmatprep.subr.mxu0 0.0
    %226 = vmatpush1.msra.mxu0 0.0
    %227 = vmatprep.subr.mxu0 0.0
    %228 = vmatpush1.msra.mxu0 0.0
    %229 = vmatprep.subr.mxu0 0.0
    %230 = vmatpush1.msra.mxu0 0.0
    %231 = vmatprep.subr.mxu0 0.0
    %232 = vmatpush1.msra.mxu0 0.0
    %233 = vmatprep.subr.mxu0 0.0
    %234 = vmatpush1.msra.mxu0 0.0
    %235 = vmatprep.subr.mxu0 0.0
    %236 = vmatpush1.msra.mxu0 0.0
    %237 = vmatprep.subr.mxu0 0.0
    %238 = vmatpush1.msra.mxu0 0.0
    %239 = vmatprep.subr.mxu0 0.0
    %240 = vmatpush1.msra.mxu0 0.0
    %241 = vmatprep.subr.mxu0 0.0
    %242 = vmatpush1.msra.mxu0 0.0
    %243 = vmatprep.subr.mxu0 0.0
    %244 = vmatpush1.msra.mxu0 0.0
    %245 = vmatprep.subr.mxu0 0.0
    %246 = vmatpush1.msra.mxu0 0.0
    %247 = vmatprep.subr.mxu0 0.0
    %248 = vmatpush1.msra.mxu0 0.0
    %249 = vmatprep.subr.mxu0 0.0
    %250 = vmatpush1.msra.mxu0 0.0
    %251 = vmatprep.subr.mxu0 0.0
    %252 = vmatpush1.msra.mxu0 0.0
    %253 = vmatprep.subr.mxu0 0.0
    %254 = vmatpush1.msra.mxu0 0.0
    %255 = vmatprep.subr.mxu0 0.0
    %256 = vmatpush1.msra.mxu0 0.0
    %257 = vmatprep.subr.mxu0 0.0
    %258 = vmatpush1.msra.mxu0 0.0
    %259 = vmatprep.subr.mxu0 0.0
    %260 = vmatpush1.msra.mxu0 0.0
    %261 = vmatprep.subr.mxu0 0.0
    %262 = vmatpush1.msra.mxu0 0.0
    %263 = vmatprep.subr.mxu0 0.0
    %264 = vmatpush1.msra.mxu0 0.0
    %265 = vmatprep.subr.mxu0 0.0
    %266 = vmatpush1.msra.mxu0 0.0
    %267 = vmatprep.mubr.f32.mxu0 0.0
    %268 = vmatmul.mubr.f32.gmra.mrb[0].mxu0 %v201
    %v269 = vpop.f32.mrb[0].mxu0
    %v270 = vadd.f32 %v197, %v269
    %v271 = vpop.f32.mrb[0].mxu0
    %v272 = vadd.f32 %v197, %v271
    %273 = vdwg.mxu0
    %274 = vmatprep.subr.mxu0 %v188
    %275 = vmatpush1.msra.mxu0 %v187
    %276 = vmatprep.subr.mxu0 %v192
    %277 = vmatpush1.msra.mxu0 %v191
    %278 = vmatprep.subr.mxu0 0.0
    %279 = vmatpush1.msra.mxu0 0.0
    %280 = vmatprep.subr.mxu0 0.0
    %281 = vmatpush1.msra.mxu0 0.0
    %282 = vmatprep.subr.mxu0 0.0
    %283 = vmatpush1.msra.mxu0 0.0
    %284 = vmatprep.subr.mxu0 0.0
    %285 = vmatpush1.msra.mxu0 0.0
    %286 = vmatprep.subr.mxu0 0.0
    %287 = vmatpush1.msra.mxu0 0.0
    %288 = vmatprep.subr.mxu0 0.0
    %289 = vmatpush1.msra.mxu0 0.0
    %290 = vmatprep.subr.mxu0 0.0
    %291 = vmatpush1.msra.mxu0 0.0
    %292 = vmatprep.subr.mxu0 0.0
    %293 = vmatpush1.msra.mxu0 0.0
    %294 = vmatprep.subr.mxu0 0.0
    %295 = vmatpush1.msra.mxu0 0.0
    %296 = vmatprep.subr.mxu0 0.0
    %297 = vmatpush1.msra.mxu0 0.0
    %298 = vmatprep.subr.mxu0 0.0
    %299 = vmatpush1.msra.mxu0 0.0
    %300 = vmatprep.subr.mxu0 0.0
    %301 = vmatpush1.msra.mxu0 0.0
    %302 = vmatprep.subr.mxu0 0.0
    %303 = vmatpush1.msra.mxu0 0.0
    %304 = vmatprep.subr.mxu0 0.0
    %305 = vmatpush1.msra.mxu0 0.0
    %306 = vmatprep.subr.mxu0 0.0
    %307 = vmatpush1.msra.mxu0 0.0
    %308 = vmatprep.subr.mxu0 0.0
    %309 = vmatpush1.msra.mxu0 0.0
    %310 = vmatprep.subr.mxu0 0.0
    %311 = vmatpush1.msra.mxu0 0.0
    %312 = vmatprep.subr.mxu0 0.0
    %313 = vmatpush1.msra.mxu0 0.0
    %314 = vmatprep.subr.mxu0 0.0
    %315 = vmatpush1.msra.mxu0 0.0
    %316 = vmatprep.subr.mxu0 0.0
    %317 = vmatpush1.msra.mxu0 0.0
    %318 = vmatprep.subr.mxu0 0.0
    %319 = vmatpush1.msra.mxu0 0.0
    %320 = vmatprep.subr.mxu0 0.0
    %321 = vmatpush1.msra.mxu0 0.0
    %322 = vmatprep.subr.mxu0 0.0
    %323 = vmatpush1.msra.mxu0 0.0
    %324 = vmatprep.subr.mxu0 0.0
    %325 = vmatpush1.msra.mxu0 0.0
    %326 = vmatprep.subr.mxu0 0.0
    %327 = vmatpush1.msra.mxu0 0.0
    %328 = vmatprep.subr.mxu0 0.0
    %329 = vmatpush1.msra.mxu0 0.0
    %330 = vmatprep.subr.mxu0 0.0
    %331 = vmatpush1.msra.mxu0 0.0
    %332 = vmatprep.subr.mxu0 0.0
    %333 = vmatpush1.msra.mxu0 0.0
    %334 = vmatprep.subr.mxu0 0.0
    %335 = vmatpush1.msra.mxu0 0.0
    %336 = vmatprep.subr.mxu0 0.0
    %337 = vmatpush1.msra.mxu0 0.0
    %338 = vmatprep.mubr.f32.mxu0 0.0
    %339 = vmatmul.mubr.f32.gmra.mrb[0].mxu0 %v201
    %v340 = vpop.f32.mrb[0].mxu0
    %v341 = vadd.f32 %v197, %v340
    %v342 = vpop.f32.mrb[0].mxu0
    %v343 = vadd.f32 %v197, %v342
    %344 = vdwg.mxu0
    %s345 = scalar_lea.vmem %s0, 97
    %v346 = vld [vmem:[%s345] ss:$8 sm:$0xf]
    %v348 = vlaneseq
    %v349 = vshrl.u32 %v348, 7
    %v350 = vsub.s32 0, %v349
    %v351 = vrot.slane %v346, %v350
    %v352 = vlaneseq
    %v353 = vshrl.u32 %v352, 7
    %v354 = vsub.s32 1, %v353
    %v355 = vrot.slane %v346, %v354
    %v356 = vlaneseq
    %v357 = vshrl.u32 %v356, 7
    %v358 = vsub.s32 2, %v357
    %v359 = vrot.slane %v346, %v358
    %v360 = vlaneseq
    %v361 = vshrl.u32 %v360, 7
    %v362 = vsub.s32 3, %v361
    %v363 = vrot.slane %v346, %v362
    %v368 = vmul.f32 %v270, %v351
    %v369 = vmul.f32 %v272, %v355
    %v370 = vmul.f32 %v341, %v359
    %v371 = vmul.f32 %v343, %v363
    %v372 = vadd.f32 %v368, %v369
    %v373 = vadd.f32 %v372, %v370
    %v374 = vadd.f32 %v373, %v371
    %375 = vadd.xlane.f32.xlu0 %v374
    %v376 = vpop.xlane.xlu0 %375
    %v377 = vmul.f32 %v376, 0.0025510204
    %v378 = vmul.f32 %v368, %v368
    %v379 = vmul.f32 %v369, %v369
    %v380 = vmul.f32 %v370, %v370
    %v381 = vmul.f32 %v371, %v371
    %v382 = vadd.f32 %v378, %v379
    %v383 = vadd.f32 %v382, %v380
    %v384 = vadd.f32 %v383, %v381
    %385 = vadd.xlane.f32.xlu0 %v384
    %v386 = vpop.xlane.xlu0 %385
    %v387 = vmul.f32 %v386, 0.0025510204
    %v388 = vmul.f32 %v377, %v377
    %v389 = vsub.f32 %v387, %v388
    %v390 = vmax.f32 %v389, 0.0
    %v391 = vsub.f32 %v368, %v377
    %v392 = vsub.f32 %v369, %v377
    %v393 = vsub.f32 %v370, %v377
    %v394 = vsub.f32 %v371, %v377
    %v395 = vadd.f32 %v390, 1e-05
    %v396 = vrsqrt.pop %v395
    %v397 = vmul.f32 %v391, %v396
    %v398 = vmul.f32 %v392, %v396
    %v399 = vmul.f32 %v393, %v396
    %v400 = vmul.f32 %v394, %v396
    %401 = vset.pattern.permute.xlu0 1
    %402 = vperm.xlu0 %401, %v193
    %v403 = vpop.permute.xlu0 %402
    %v405 = vmul.f32 %v397, %v403
    %v406 = vmul.f32 %v398, %v403
    %v407 = vmul.f32 %v399, %v403
    %v408 = vmul.f32 %v400, %v403
    %409 = vset.pattern.permute.xlu0 2
    %410 = vperm.xlu0 %409, %v193
    %v411 = vpop.permute.xlu0 %410
    %v413 = vadd.f32 %v405, %v411
    %v414 = vadd.f32 %v406, %v411
    %v415 = vadd.f32 %v407, %v411
    %v416 = vadd.f32 %v408, %v411
    %v417 = vmax.f32 %v413, 0.0
    %v418 = vmax.f32 %v414, 0.0
    %v419 = vmax.f32 %v415, 0.0
    %v420 = vmax.f32 %v416, 0.0
    %421 = vst [vmem:[#allocation2] sm:$0xff] 0.0
    %422 = vst [vmem:[#allocation2 + $0x28] sm:$0xff] 0.0
    %423 = vst [vmem:[#allocation2 + $0x8] sm:$0xff] %v417
    %424 = vst [vmem:[#allocation2 + $0x10] sm:$0xff] %v418
    %425 = vst [vmem:[#allocation2 + $0x18] sm:$0xff] %v419
    %426 = vst [vmem:[#allocation2 + $0x20] sm:$0xff] %v420
    %v427 = vld [vmem:[#allocation2] sm:$0xff]
    %v428 = vld [vmem:[#allocation2 + $0x8] sm:$0xff]
    %v429 = vld [vmem:[#allocation2 + $0x10] sm:$0xff]
    %v430 = vld [vmem:[#allocation2 + $0x18] sm:$0xff]
    %v431 = vld [vmem:[#allocation2 + $0x20] sm:$0xff]
    %s432 = scalar_lea.vmem %s0, 64
    %v433 = vld [vmem:[%s432] ss:$8 sm:$0xf]
    %v435 = vlaneseq
    %v436 = vshrl.u32 %v435, 7
    %v437 = vsub.s32 0, %v436
    %v438 = vrot.slane %v433, %v437
    %v439 = vlaneseq
    %v440 = vshrl.u32 %v439, 7
    %v441 = vsub.s32 1, %v440
    %v442 = vrot.slane %v433, %v441
    %v443 = vlaneseq
    %v444 = vshrl.u32 %v443, 7
    %v445 = vsub.s32 2, %v444
    %v446 = vrot.slane %v433, %v445
    %v447 = vlaneseq
    %v448 = vshrl.u32 %v447, 7
    %v449 = vsub.s32 3, %v448
    %v450 = vrot.slane %v433, %v449
    %451 = vrot.lane.b32.xlu0 %v438, 113
    %v452 = vpop.permute.xlu0 %451
    %453 = vrot.lane.b32.xlu0 %v442, 113
    %v454 = vpop.permute.xlu0 %453
    %455 = vrot.lane.b32.xlu0 %v446, 113
    %v456 = vpop.permute.xlu0 %455
    %457 = vrot.lane.b32.xlu0 %v450, 113
    %v458 = vpop.permute.xlu0 %457
    %vm459 = vcmask 924672
    %v460 = vsel %vm459, %v452, %v454
    %v461 = vsel %vm459, %v454, %v456
    %v462 = vsel %vm459, %v456, %v458
    %v468 = vmul.f32 %v427, %v452
    %v469 = vmul.f32 %v428, %v460
    %v470 = vmul.f32 %v429, %v461
    %v471 = vmul.f32 %v430, %v462
    %v472 = vmul.f32 %v431, %v458
    %478 = vrot.lane.b32.xlu0 %v468, 15
    %v479 = vpop.permute.xlu0 %478
    %480 = vrot.lane.b32.xlu0 %v469, 15
    %v481 = vpop.permute.xlu0 %480
    %482 = vrot.lane.b32.xlu0 %v470, 15
    %v483 = vpop.permute.xlu0 %482
    %484 = vrot.lane.b32.xlu0 %v471, 15
    %v485 = vpop.permute.xlu0 %484
    %486 = vrot.lane.b32.xlu0 %v472, 15
    %v487 = vpop.permute.xlu0 %486
    %vm488 = vcmask 121856
    %v489 = vsel %vm488, %v479, %v481
    %v490 = vsel %vm488, %v481, %v483
    %v491 = vsel %vm488, %v483, %v485
    %v492 = vsel %vm488, %v485, %v487
    %497 = vst [vmem:[#allocation3] sm:$0xff] %v489
    %498 = vst [vmem:[#allocation3 + $0x8] sm:$0xff] %v490
    %499 = vst [vmem:[#allocation3 + $0x10] sm:$0xff] %v491
    %500 = vst [vmem:[#allocation3 + $0x18] sm:$0xff] %v492
    %v501 = vld [vmem:[#allocation2] sm:$0xff]
    %v502 = vld [vmem:[#allocation2 + $0x8] sm:$0xff]
    %v503 = vld [vmem:[#allocation2 + $0x10] sm:$0xff]
    %v504 = vld [vmem:[#allocation2 + $0x18] sm:$0xff]
    %v505 = vld [vmem:[#allocation2 + $0x20] sm:$0xff]
    %s506 = scalar_lea.vmem %s0, 65
    %v507 = vld [vmem:[%s506] ss:$8 sm:$0xf]
    %v509 = vlaneseq
    %v510 = vshrl.u32 %v509, 7
    %v511 = vsub.s32 0, %v510
    %v512 = vrot.slane %v507, %v511
    %v513 = vlaneseq
    %v514 = vshrl.u32 %v513, 7
    %v515 = vsub.s32 1, %v514
    %v516 = vrot.slane %v507, %v515
    %v517 = vlaneseq
    %v518 = vshrl.u32 %v517, 7
    %v519 = vsub.s32 2, %v518
    %v520 = vrot.slane %v507, %v519
    %v521 = vlaneseq
    %v522 = vshrl.u32 %v521, 7
    %v523 = vsub.s32 3, %v522
    %v524 = vrot.slane %v507, %v523
    %525 = vrot.lane.b32.xlu0 %v512, 114
    %v526 = vpop.permute.xlu0 %525
    %527 = vrot.lane.b32.xlu0 %v516, 114
    %v528 = vpop.permute.xlu0 %527
    %529 = vrot.lane.b32.xlu0 %v520, 114
    %v530 = vpop.permute.xlu0 %529
    %531 = vrot.lane.b32.xlu0 %v524, 114
    %v532 = vpop.permute.xlu0 %531
    %vm533 = vcmask 932864
    %v534 = vsel %vm533, %v526, %v528
    %v535 = vsel %vm533, %v528, %v530
    %v536 = vsel %vm533, %v530, %v532
    %v542 = vmul.f32 %v501, %v526
    %v543 = vmul.f32 %v502, %v534
    %v544 = vmul.f32 %v503, %v535
    %v545 = vmul.f32 %v504, %v536
    %v546 = vmul.f32 %v505, %v532
    %552 = vrot.lane.b32.xlu0 %v542, 14
    %v553 = vpop.permute.xlu0 %552
    %554 = vrot.lane.b32.xlu0 %v543, 14
    %v555 = vpop.permute.xlu0 %554
    %556 = vrot.lane.b32.xlu0 %v544, 14
    %v557 = vpop.permute.xlu0 %556
    %558 = vrot.lane.b32.xlu0 %v545, 14
    %v559 = vpop.permute.xlu0 %558
    %560 = vrot.lane.b32.xlu0 %v546, 14
    %v561 = vpop.permute.xlu0 %560
    %vm562 = vcmask 113664
    %v563 = vsel %vm562, %v553, %v555
    %v564 = vsel %vm562, %v555, %v557
    %v565 = vsel %vm562, %v557, %v559
    %v566 = vsel %vm562, %v559, %v561
    %571 = vst [vmem:[#allocation3 + $0x20] sm:$0xff] %v563
    %572 = vst [vmem:[#allocation3 + $0x28] sm:$0xff] %v564
    %573 = vst [vmem:[#allocation3 + $0x30] sm:$0xff] %v565
    %574 = vst [vmem:[#allocation3 + $0x38] sm:$0xff] %v566
    %v575 = vld [vmem:[#allocation2] sm:$0xff]
    %v576 = vld [vmem:[#allocation2 + $0x8] sm:$0xff]
    %v577 = vld [vmem:[#allocation2 + $0x10] sm:$0xff]
    %v578 = vld [vmem:[#allocation2 + $0x18] sm:$0xff]
    %v579 = vld [vmem:[#allocation2 + $0x20] sm:$0xff]
    %s580 = scalar_lea.vmem %s0, 66
    %v581 = vld [vmem:[%s580] ss:$8 sm:$0xf]
    %v583 = vlaneseq
    %v584 = vshrl.u32 %v583, 7
    %v585 = vsub.s32 0, %v584
    %v586 = vrot.slane %v581, %v585
    %v587 = vlaneseq
    %v588 = vshrl.u32 %v587, 7
    %v589 = vsub.s32 1, %v588
    %v590 = vrot.slane %v581, %v589
    %v591 = vlaneseq
    %v592 = vshrl.u32 %v591, 7
    %v593 = vsub.s32 2, %v592
    %v594 = vrot.slane %v581, %v593
    %v595 = vlaneseq
    %v596 = vshrl.u32 %v595, 7
    %v597 = vsub.s32 3, %v596
    %v598 = vrot.slane %v581, %v597
    %599 = vrot.lane.b32.xlu0 %v586, 115
    %v600 = vpop.permute.xlu0 %599
    %601 = vrot.lane.b32.xlu0 %v590, 115
    %v602 = vpop.permute.xlu0 %601
    %603 = vrot.lane.b32.xlu0 %v594, 115
    %v604 = vpop.permute.xlu0 %603
    %605 = vrot.lane.b32.xlu0 %v598, 115
    %v606 = vpop.permute.xlu0 %605
    %vm607 = vcmask 941056
    %v608 = vsel %vm607, %v600, %v602
    %v609 = vsel %vm607, %v602, %v604
    %v610 = vsel %vm607, %v604, %v606
    %v616 = vmul.f32 %v575, %v600
    %v617 = vmul.f32 %v576, %v608
    %v618 = vmul.f32 %v577, %v609
    %v619 = vmul.f32 %v578, %v610
    %v620 = vmul.f32 %v579, %v606
    %626 = vrot.lane.b32.xlu0 %v616, 13
    %v627 = vpop.permute.xlu0 %626
    %628 = vrot.lane.b32.xlu0 %v617, 13
    %v629 = vpop.permute.xlu0 %628
    %630 = vrot.lane.b32.xlu0 %v618, 13
    %v631 = vpop.permute.xlu0 %630
    %632 = vrot.lane.b32.xlu0 %v619, 13
    %v633 = vpop.permute.xlu0 %632
    %634 = vrot.lane.b32.xlu0 %v620, 13
    %v635 = vpop.permute.xlu0 %634
    %vm636 = vcmask 105472
    %v637 = vsel %vm636, %v627, %v629
    %v638 = vsel %vm636, %v629, %v631
    %v639 = vsel %vm636, %v631, %v633
    %v640 = vsel %vm636, %v633, %v635
    %645 = vst [vmem:[#allocation3 + $0x40] sm:$0xff] %v637
    %646 = vst [vmem:[#allocation3 + $0x48] sm:$0xff] %v638
    %647 = vst [vmem:[#allocation3 + $0x50] sm:$0xff] %v639
    %648 = vst [vmem:[#allocation3 + $0x58] sm:$0xff] %v640
    %v649 = vld [vmem:[#allocation2] sm:$0xff]
    %v650 = vld [vmem:[#allocation2 + $0x8] sm:$0xff]
    %v651 = vld [vmem:[#allocation2 + $0x10] sm:$0xff]
    %v652 = vld [vmem:[#allocation2 + $0x18] sm:$0xff]
    %v653 = vld [vmem:[#allocation2 + $0x20] sm:$0xff]
    %s654 = scalar_lea.vmem %s0, 67
    %v655 = vld [vmem:[%s654] ss:$8 sm:$0xf]
    %v657 = vlaneseq
    %v658 = vshrl.u32 %v657, 7
    %v659 = vsub.s32 0, %v658
    %v660 = vrot.slane %v655, %v659
    %v661 = vlaneseq
    %v662 = vshrl.u32 %v661, 7
    %v663 = vsub.s32 1, %v662
    %v664 = vrot.slane %v655, %v663
    %v665 = vlaneseq
    %v666 = vshrl.u32 %v665, 7
    %v667 = vsub.s32 2, %v666
    %v668 = vrot.slane %v655, %v667
    %v669 = vlaneseq
    %v670 = vshrl.u32 %v669, 7
    %v671 = vsub.s32 3, %v670
    %v672 = vrot.slane %v655, %v671
    %673 = vrot.lane.b32.xlu0 %v660, 127
    %v674 = vpop.permute.xlu0 %673
    %675 = vrot.lane.b32.xlu0 %v664, 127
    %v676 = vpop.permute.xlu0 %675
    %677 = vrot.lane.b32.xlu0 %v668, 127
    %v678 = vpop.permute.xlu0 %677
    %679 = vrot.lane.b32.xlu0 %v672, 127
    %v680 = vpop.permute.xlu0 %679
    %vm681 = vcmask 1039360
    %v682 = vsel %vm681, %v674, %v676
    %v683 = vsel %vm681, %v676, %v678
    %v684 = vsel %vm681, %v678, %v680
    %v690 = vmul.f32 %v649, %v674
    %v691 = vmul.f32 %v650, %v682
    %v692 = vmul.f32 %v651, %v683
    %v693 = vmul.f32 %v652, %v684
    %v694 = vmul.f32 %v653, %v680
    %700 = vrot.lane.b32.xlu0 %v690, 1
    %v701 = vpop.permute.xlu0 %700
    %702 = vrot.lane.b32.xlu0 %v691, 1
    %v703 = vpop.permute.xlu0 %702
    %704 = vrot.lane.b32.xlu0 %v692, 1
    %v705 = vpop.permute.xlu0 %704
    %706 = vrot.lane.b32.xlu0 %v693, 1
    %v707 = vpop.permute.xlu0 %706
    %708 = vrot.lane.b32.xlu0 %v694, 1
    %v709 = vpop.permute.xlu0 %708
    %vm710 = vcmask 7168
    %v711 = vsel %vm710, %v701, %v703
    %v712 = vsel %vm710, %v703, %v705
    %v713 = vsel %vm710, %v705, %v707
    %v714 = vsel %vm710, %v707, %v709
    %719 = vst [vmem:[#allocation3 + $0x60] sm:$0xff] %v711
    %720 = vst [vmem:[#allocation3 + $0x68] sm:$0xff] %v712
    %721 = vst [vmem:[#allocation3 + $0x70] sm:$0xff] %v713
    %722 = vst [vmem:[#allocation3 + $0x78] sm:$0xff] %v714
    %v723 = vld [vmem:[#allocation2 + $0x8] sm:$0xff]
    %v724 = vld [vmem:[#allocation2 + $0x10] sm:$0xff]
    %v725 = vld [vmem:[#allocation2 + $0x18] sm:$0xff]
    %v726 = vld [vmem:[#allocation2 + $0x20] sm:$0xff]
    %s727 = scalar_lea.vmem %s0, 68
    %v728 = vld [vmem:[%s727] ss:$8 sm:$0xf]
    %v730 = vlaneseq
    %v731 = vshrl.u32 %v730, 7
    %v732 = vsub.s32 0, %v731
    %v733 = vrot.slane %v728, %v732
    %v734 = vlaneseq
    %v735 = vshrl.u32 %v734, 7
    %v736 = vsub.s32 1, %v735
    %v737 = vrot.slane %v728, %v736
    %v738 = vlaneseq
    %v739 = vshrl.u32 %v738, 7
    %v740 = vsub.s32 2, %v739
    %v741 = vrot.slane %v728, %v740
    %v742 = vlaneseq
    %v743 = vshrl.u32 %v742, 7
    %v744 = vsub.s32 3, %v743
    %v745 = vrot.slane %v728, %v744
    %v750 = vmul.f32 %v723, %v733
    %v751 = vmul.f32 %v724, %v737
    %v752 = vmul.f32 %v725, %v741
    %v753 = vmul.f32 %v726, %v745
    %754 = vst [vmem:[#allocation3 + $0x80] sm:$0xff] %v750
    %755 = vst [vmem:[#allocation3 + $0x88] sm:$0xff] %v751
    %756 = vst [vmem:[#allocation3 + $0x90] sm:$0xff] %v752
    %757 = vst [vmem:[#allocation3 + $0x98] sm:$0xff] %v753
    %v758 = vld [vmem:[#allocation2 + $0x8] sm:$0xff]
    %v759 = vld [vmem:[#allocation2 + $0x10] sm:$0xff]
    %v760 = vld [vmem:[#allocation2 + $0x18] sm:$0xff]
    %v761 = vld [vmem:[#allocation2 + $0x20] sm:$0xff]
    %v762 = vld [vmem:[#allocation2 + $0x28] sm:$0xff]
    %s763 = scalar_lea.vmem %s0, 69
    %v764 = vld [vmem:[%s763] ss:$8 sm:$0xf]
    %v766 = vlaneseq
    %v767 = vshrl.u32 %v766, 7
    %v768 = vsub.s32 0, %v767
    %v769 = vrot.slane %v764, %v768
    %v770 = vlaneseq
    %v771 = vshrl.u32 %v770, 7
    %v772 = vsub.s32 1, %v771
    %v773 = vrot.slane %v764, %v772
    %v774 = vlaneseq
    %v775 = vshrl.u32 %v774, 7
    %v776 = vsub.s32 2, %v775
    %v777 = vrot.slane %v764, %v776
    %v778 = vlaneseq
    %v779 = vshrl.u32 %v778, 7
    %v780 = vsub.s32 3, %v779
    %v781 = vrot.slane %v764, %v780
    %782 = vrot.lane.b32.xlu0 %v769, 1
    %v783 = vpop.permute.xlu0 %782
    %784 = vrot.lane.b32.xlu0 %v773, 1
    %v785 = vpop.permute.xlu0 %784
    %786 = vrot.lane.b32.xlu0 %v777, 1
    %v787 = vpop.permute.xlu0 %786
    %788 = vrot.lane.b32.xlu0 %v781, 1
    %v789 = vpop.permute.xlu0 %788
    %v790 = vsel %vm710, %v783, %v785
    %v791 = vsel %vm710, %v785, %v787
    %v792 = vsel %vm710, %v787, %v789
    %v798 = vmul.f32 %v758, %v783
    %v799 = vmul.f32 %v759, %v790
    %v800 = vmul.f32 %v760, %v791
    %v801 = vmul.f32 %v761, %v792
    %v802 = vmul.f32 %v762, %v789
    %808 = vrot.lane.b32.xlu0 %v798, 127
    %v809 = vpop.permute.xlu0 %808
    %810 = vrot.lane.b32.xlu0 %v799, 127
    %v811 = vpop.permute.xlu0 %810
    %812 = vrot.lane.b32.xlu0 %v800, 127
    %v813 = vpop.permute.xlu0 %812
    %814 = vrot.lane.b32.xlu0 %v801, 127
    %v815 = vpop.permute.xlu0 %814
    %816 = vrot.lane.b32.xlu0 %v802, 127
    %v817 = vpop.permute.xlu0 %816
    %v818 = vsel %vm681, %v809, %v811
    %v819 = vsel %vm681, %v811, %v813
    %v820 = vsel %vm681, %v813, %v815
    %v821 = vsel %vm681, %v815, %v817
    %826 = vst [vmem:[#allocation3 + $0xa0] sm:$0xff] %v818
    %827 = vst [vmem:[#allocation3 + $0xa8] sm:$0xff] %v819
    %828 = vst [vmem:[#allocation3 + $0xb0] sm:$0xff] %v820
    %829 = vst [vmem:[#allocation3 + $0xb8] sm:$0xff] %v821
    %v830 = vld [vmem:[#allocation2 + $0x8] sm:$0xff]
    %v831 = vld [vmem:[#allocation2 + $0x10] sm:$0xff]
    %v832 = vld [vmem:[#allocation2 + $0x18] sm:$0xff]
    %v833 = vld [vmem:[#allocation2 + $0x20] sm:$0xff]
    %v834 = vld [vmem:[#allocation2 + $0x28] sm:$0xff]
    %s835 = scalar_lea.vmem %s0, 70
    %v836 = vld [vmem:[%s835] ss:$8 sm:$0xf]
    %v838 = vlaneseq
    %v839 = vshrl.u32 %v838, 7
    %v840 = vsub.s32 0, %v839
    %v841 = vrot.slane %v836, %v840
    %v842 = vlaneseq
    %v843 = vshrl.u32 %v842, 7
    %v844 = vsub.s32 1, %v843
    %v845 = vrot.slane %v836, %v844
    %v846 = vlaneseq
    %v847 = vshrl.u32 %v846, 7
    %v848 = vsub.s32 2, %v847
    %v849 = vrot.slane %v836, %v848
    %v850 = vlaneseq
    %v851 = vshrl.u32 %v850, 7
    %v852 = vsub.s32 3, %v851
    %v853 = vrot.slane %v836, %v852
    %854 = vrot.lane.b32.xlu0 %v841, 13
    %v855 = vpop.permute.xlu0 %854
    %856 = vrot.lane.b32.xlu0 %v845, 13
    %v857 = vpop.permute.xlu0 %856
    %858 = vrot.lane.b32.xlu0 %v849, 13
    %v859 = vpop.permute.xlu0 %858
    %860 = vrot.lane.b32.xlu0 %v853, 13
    %v861 = vpop.permute.xlu0 %860
    %v862 = vsel %vm636, %v855, %v857
    %v863 = vsel %vm636, %v857, %v859
    %v864 = vsel %vm636, %v859, %v861
    %v870 = vmul.f32 %v830, %v855
    %v871 = vmul.f32 %v831, %v862
    %v872 = vmul.f32 %v832, %v863
    %v873 = vmul.f32 %v833, %v864
    %v874 = vmul.f32 %v834, %v861
    %880 = vrot.lane.b32.xlu0 %v870, 115
    %v881 = vpop.permute.xlu0 %880
    %882 = vrot.lane.b32.xlu0 %v871, 115
    %v883 = vpop.permute.xlu0 %882
    %884 = vrot.lane.b32.xlu0 %v872, 115
    %v885 = vpop.permute.xlu0 %884
    %886 = vrot.lane.b32.xlu0 %v873, 115
    %v887 = vpop.permute.xlu0 %886
    %888 = vrot.lane.b32.xlu0 %v874, 115
    %v889 = vpop.permute.xlu0 %888
    %v890 = vsel %vm607, %v881, %v883
    %v891 = vsel %vm607, %v883, %v885
    %v892 = vsel %vm607, %v885, %v887
    %v893 = vsel %vm607, %v887, %v889
    %898 = vst [vmem:[#allocation3 + $0xc0] sm:$0xff] %v890
    %899 = vst [vmem:[#allocation3 + $0xc8] sm:$0xff] %v891
    %900 = vst [vmem:[#allocation3 + $0xd0] sm:$0xff] %v892
    %901 = vst [vmem:[#allocation3 + $0xd8] sm:$0xff] %v893
    %v902 = vld [vmem:[#allocation2 + $0x8] sm:$0xff]
    %v903 = vld [vmem:[#allocation2 + $0x10] sm:$0xff]
    %v904 = vld [vmem:[#allocation2 + $0x18] sm:$0xff]
    %v905 = vld [vmem:[#allocation2 + $0x20] sm:$0xff]
    %v906 = vld [vmem:[#allocation2 + $0x28] sm:$0xff]
    %s907 = scalar_lea.vmem %s0, 71
    %v908 = vld [vmem:[%s907] ss:$8 sm:$0xf]
    %v910 = vlaneseq
    %v911 = vshrl.u32 %v910, 7
    %v912 = vsub.s32 0, %v911
    %v913 = vrot.slane %v908, %v912
    %v914 = vlaneseq
    %v915 = vshrl.u32 %v914, 7
    %v916 = vsub.s32 1, %v915
    %v917 = vrot.slane %v908, %v916
    %v918 = vlaneseq
    %v919 = vshrl.u32 %v918, 7
    %v920 = vsub.s32 2, %v919
    %v921 = vrot.slane %v908, %v920
    %v922 = vlaneseq
    %v923 = vshrl.u32 %v922, 7
    %v924 = vsub.s32 3, %v923
    %v925 = vrot.slane %v908, %v924
    %926 = vrot.lane.b32.xlu0 %v913, 14
    %v927 = vpop.permute.xlu0 %926
    %928 = vrot.lane.b32.xlu0 %v917, 14
    %v929 = vpop.permute.xlu0 %928
    %930 = vrot.lane.b32.xlu0 %v921, 14
    %v931 = vpop.permute.xlu0 %930
    %932 = vrot.lane.b32.xlu0 %v925, 14
    %v933 = vpop.permute.xlu0 %932
    %v934 = vsel %vm562, %v927, %v929
    %v935 = vsel %vm562, %v929, %v931
    %v936 = vsel %vm562, %v931, %v933
    %v942 = vmul.f32 %v902, %v927
    %v943 = vmul.f32 %v903, %v934
    %v944 = vmul.f32 %v904, %v935
    %v945 = vmul.f32 %v905, %v936
    %v946 = vmul.f32 %v906, %v933
    %952 = vrot.lane.b32.xlu0 %v942, 114
    %v953 = vpop.permute.xlu0 %952
    %954 = vrot.lane.b32.xlu0 %v943, 114
    %v955 = vpop.permute.xlu0 %954
    %956 = vrot.lane.b32.xlu0 %v944, 114
    %v957 = vpop.permute.xlu0 %956
    %958 = vrot.lane.b32.xlu0 %v945, 114
    %v959 = vpop.permute.xlu0 %958
    %960 = vrot.lane.b32.xlu0 %v946, 114
    %v961 = vpop.permute.xlu0 %960
    %v962 = vsel %vm533, %v953, %v955
    %v963 = vsel %vm533, %v955, %v957
    %v964 = vsel %vm533, %v957, %v959
    %v965 = vsel %vm533, %v959, %v961
    %970 = vst [vmem:[#allocation3 + $0xe0] sm:$0xff] %v962
    %971 = vst [vmem:[#allocation3 + $0xe8] sm:$0xff] %v963
    %972 = vst [vmem:[#allocation3 + $0xf0] sm:$0xff] %v964
    %973 = vst [vmem:[#allocation3 + $0xf8] sm:$0xff] %v965
    %v974 = vld [vmem:[#allocation2 + $0x8] sm:$0xff]
    %v975 = vld [vmem:[#allocation2 + $0x10] sm:$0xff]
    %v976 = vld [vmem:[#allocation2 + $0x18] sm:$0xff]
    %v977 = vld [vmem:[#allocation2 + $0x20] sm:$0xff]
    %v978 = vld [vmem:[#allocation2 + $0x28] sm:$0xff]
    %s979 = scalar_lea.vmem %s0, 96
    %v980 = vld [vmem:[%s979] ss:$8 sm:$0xf]
    %v982 = vlaneseq
    %v983 = vshrl.u32 %v982, 7
    %v984 = vsub.s32 0, %v983
    %v985 = vrot.slane %v980, %v984
    %v986 = vlaneseq
    %v987 = vshrl.u32 %v986, 7
    %v988 = vsub.s32 1, %v987
    %v989 = vrot.slane %v980, %v988
    %v990 = vlaneseq
    %v991 = vshrl.u32 %v990, 7
    %v992 = vsub.s32 2, %v991
    %v993 = vrot.slane %v980, %v992
    %v994 = vlaneseq
    %v995 = vshrl.u32 %v994, 7
    %v996 = vsub.s32 3, %v995
    %v997 = vrot.slane %v980, %v996
    %998 = vrot.lane.b32.xlu0 %v985, 15
    %v999 = vpop.permute.xlu0 %998
    %1000 = vrot.lane.b32.xlu0 %v989, 15
    %v1001 = vpop.permute.xlu0 %1000
    %1002 = vrot.lane.b32.xlu0 %v993, 15
    %v1003 = vpop.permute.xlu0 %1002
    %1004 = vrot.lane.b32.xlu0 %v997, 15
    %v1005 = vpop.permute.xlu0 %1004
    %v1006 = vsel %vm488, %v999, %v1001
    %v1007 = vsel %vm488, %v1001, %v1003
    %v1008 = vsel %vm488, %v1003, %v1005
    %v1014 = vmul.f32 %v974, %v999
    %v1015 = vmul.f32 %v975, %v1006
    %v1016 = vmul.f32 %v976, %v1007
    %v1017 = vmul.f32 %v977, %v1008
    %v1018 = vmul.f32 %v978, %v1005
    %1024 = vrot.lane.b32.xlu0 %v1014, 113
    %v1025 = vpop.permute.xlu0 %1024
    %1026 = vrot.lane.b32.xlu0 %v1015, 113
    %v1027 = vpop.permute.xlu0 %1026
    %1028 = vrot.lane.b32.xlu0 %v1016, 113
    %v1029 = vpop.permute.xlu0 %1028
    %1030 = vrot.lane.b32.xlu0 %v1017, 113
    %v1031 = vpop.permute.xlu0 %1030
    %1032 = vrot.lane.b32.xlu0 %v1018, 113
    %v1033 = vpop.permute.xlu0 %1032
    %v1034 = vsel %vm459, %v1025, %v1027
    %v1035 = vsel %vm459, %v1027, %v1029
    %v1036 = vsel %vm459, %v1029, %v1031
    %v1037 = vsel %vm459, %v1031, %v1033
    %1042 = vst [vmem:[#allocation3 + $0x100] sm:$0xff] %v1034
    %1043 = vst [vmem:[#allocation3 + $0x108] sm:$0xff] %v1035
    %1044 = vst [vmem:[#allocation3 + $0x110] sm:$0xff] %v1036
    %1045 = vst [vmem:[#allocation3 + $0x118] sm:$0xff] %v1037
    %v1046 = vld [vmem:[%s1 + $0x40] sm:$0xff]
    %v1047 = vld [vmem:[%s1 + $0x50] sm:$0xff]
    %v1048 = vld [vmem:[#allocation3] sm:$0xff]
    %v1049 = vld [vmem:[#allocation3 + $0x8] sm:$0xff]
    %v1050 = vld [vmem:[#allocation3 + $0x10] sm:$0xff]
    %v1051 = vld [vmem:[#allocation3 + $0x18] sm:$0xff]
    %v1052 = vld [vmem:[#allocation3 + $0x20] sm:$0xff]
    %v1053 = vld [vmem:[#allocation3 + $0x28] sm:$0xff]
    %v1054 = vld [vmem:[#allocation3 + $0x30] sm:$0xff]
    %v1055 = vld [vmem:[#allocation3 + $0x38] sm:$0xff]
    %v1056 = vld [vmem:[#allocation3 + $0x40] sm:$0xff]
    %v1057 = vld [vmem:[#allocation3 + $0x48] sm:$0xff]
    %v1058 = vld [vmem:[#allocation3 + $0x50] sm:$0xff]
    %v1059 = vld [vmem:[#allocation3 + $0x58] sm:$0xff]
    %v1060 = vld [vmem:[#allocation3 + $0x60] sm:$0xff]
    %v1061 = vld [vmem:[#allocation3 + $0x68] sm:$0xff]
    %v1062 = vld [vmem:[#allocation3 + $0x70] sm:$0xff]
    %v1063 = vld [vmem:[#allocation3 + $0x78] sm:$0xff]
    %v1064 = vld [vmem:[#allocation3 + $0x80] sm:$0xff]
    %v1065 = vld [vmem:[#allocation3 + $0x88] sm:$0xff]
    %v1066 = vld [vmem:[#allocation3 + $0x90] sm:$0xff]
    %v1067 = vld [vmem:[#allocation3 + $0x98] sm:$0xff]
    %v1068 = vld [vmem:[#allocation3 + $0xa0] sm:$0xff]
    %v1069 = vld [vmem:[#allocation3 + $0xa8] sm:$0xff]
    %v1070 = vld [vmem:[#allocation3 + $0xb0] sm:$0xff]
    %v1071 = vld [vmem:[#allocation3 + $0xb8] sm:$0xff]
    %v1072 = vld [vmem:[#allocation3 + $0xc0] sm:$0xff]
    %v1073 = vld [vmem:[#allocation3 + $0xc8] sm:$0xff]
    %v1074 = vld [vmem:[#allocation3 + $0xd0] sm:$0xff]
    %v1075 = vld [vmem:[#allocation3 + $0xd8] sm:$0xff]
    %v1076 = vld [vmem:[#allocation3 + $0xe0] sm:$0xff]
    %v1077 = vld [vmem:[#allocation3 + $0xe8] sm:$0xff]
    %v1078 = vld [vmem:[#allocation3 + $0xf0] sm:$0xff]
    %v1079 = vld [vmem:[#allocation3 + $0xf8] sm:$0xff]
    %v1080 = vld [vmem:[#allocation3 + $0x100] sm:$0xff]
    %v1081 = vld [vmem:[#allocation3 + $0x108] sm:$0xff]
    %v1082 = vld [vmem:[#allocation3 + $0x110] sm:$0xff]
    %v1083 = vld [vmem:[#allocation3 + $0x118] sm:$0xff]
    %v1084 = vld [vmem:[%s2] sm:$0xff]
    %v1085 = vld [vmem:[%s2 + $0x8] sm:$0xff]
    %1087 = vset.pattern.permute.xlu0 3
    %1088 = vperm.xlu0 %1087, %v1084
    %v1089 = vpop.permute.xlu0 %1088
    %1092 = vset.pattern.permute.xlu0 3
    %1093 = vperm.xlu0 %1092, %v1085
    %v1094 = vpop.permute.xlu0 %1093
    %vm1096 = vcmask 588800
    %v1098 = vsel %vm1096, %v1046, 0
    %v1101 = vsel %vm1096, %v1047, 0
    %1103 = vmatprep.subr.mxu0 %v1049
    %1104 = vmatpush1.msra.mxu0 %v1048
    %1105 = vmatprep.subr.mxu0 %v1053
    %1106 = vmatpush1.msra.mxu0 %v1052
    %1107 = vmatprep.subr.mxu0 %v1057
    %1108 = vmatpush1.msra.mxu0 %v1056
    %1109 = vmatprep.subr.mxu0 %v1061
    %1110 = vmatpush1.msra.mxu0 %v1060
    %1111 = vmatprep.subr.mxu0 %v1065
    %1112 = vmatpush1.msra.mxu0 %v1064
    %1113 = vmatprep.subr.mxu0 %v1069
    %1114 = vmatpush1.msra.mxu0 %v1068
    %1115 = vmatprep.subr.mxu0 %v1073
    %1116 = vmatpush1.msra.mxu0 %v1072
    %1117 = vmatprep.subr.mxu0 %v1077
    %1118 = vmatpush1.msra.mxu0 %v1076
    %1119 = vmatprep.subr.mxu0 %v1081
    %1120 = vmatpush1.msra.mxu0 %v1080
    %1121 = vmatprep.subr.mxu0 0.0
    %1122 = vmatpush1.msra.mxu0 0.0
    %1123 = vmatprep.subr.mxu0 0.0
    %1124 = vmatpush1.msra.mxu0 0.0
    %1125 = vmatprep.subr.mxu0 0.0
    %1126 = vmatpush1.msra.mxu0 0.0
    %1127 = vmatprep.subr.mxu0 0.0
    %1128 = vmatpush1.msra.mxu0 0.0
    %1129 = vmatprep.subr.mxu0 0.0
    %1130 = vmatpush1.msra.mxu0 0.0
    %1131 = vmatprep.subr.mxu0 0.0
    %1132 = vmatpush1.msra.mxu0 0.0
    %1133 = vmatprep.subr.mxu0 0.0
    %1134 = vmatpush1.msra.mxu0 0.0
    %1135 = vmatprep.subr.mxu0 0.0
    %1136 = vmatpush1.msra.mxu0 0.0
    %1137 = vmatprep.subr.mxu0 0.0
    %1138 = vmatpush1.msra.mxu0 0.0
    %1139 = vmatprep.subr.mxu0 0.0
    %1140 = vmatpush1.msra.mxu0 0.0
    %1141 = vmatprep.subr.mxu0 0.0
    %1142 = vmatpush1.msra.mxu0 0.0
    %1143 = vmatprep.subr.mxu0 0.0
    %1144 = vmatpush1.msra.mxu0 0.0
    %1145 = vmatprep.subr.mxu0 0.0
    %1146 = vmatpush1.msra.mxu0 0.0
    %1147 = vmatprep.subr.mxu0 0.0
    %1148 = vmatpush1.msra.mxu0 0.0
    %1149 = vmatprep.subr.mxu0 0.0
    %1150 = vmatpush1.msra.mxu0 0.0
    %1151 = vmatprep.subr.mxu0 0.0
    %1152 = vmatpush1.msra.mxu0 0.0
    %1153 = vmatprep.subr.mxu0 0.0
    %1154 = vmatpush1.msra.mxu0 0.0
    %1155 = vmatprep.subr.mxu0 0.0
    %1156 = vmatpush1.msra.mxu0 0.0
    %1157 = vmatprep.subr.mxu0 0.0
    %1158 = vmatpush1.msra.mxu0 0.0
    %1159 = vmatprep.subr.mxu0 0.0
    %1160 = vmatpush1.msra.mxu0 0.0
    %1161 = vmatprep.subr.mxu0 0.0
    %1162 = vmatpush1.msra.mxu0 0.0
    %1163 = vmatprep.subr.mxu0 0.0
    %1164 = vmatpush1.msra.mxu0 0.0
    %1165 = vmatprep.subr.mxu0 0.0
    %1166 = vmatpush1.msra.mxu0 0.0
    %1167 = vmatprep.mubr.f32.mxu0 0.0
    %1168 = vmatmul.mubr.f32.gmra.mrb[0].mxu0 %v1098
    %v1169 = vpop.f32.mrb[0].mxu0
    %v1170 = vadd.f32 %v1089, %v1169
    %v1171 = vpop.f32.mrb[0].mxu0
    %v1172 = vadd.f32 %v1089, %v1171
    %1173 = vmatprep.mubr.f32.mxu0 0.0
    %1174 = vmatmul.mubr.f32.gmra.mrb[0].mxu0 %v1101
    %v1175 = vpop.f32.mrb[0].mxu0
    %v1176 = vadd.f32 %v1094, %v1175
    %v1177 = vpop.f32.mrb[0].mxu0
    %v1178 = vadd.f32 %v1094, %v1177
    %1179 = vdwg.mxu0
    %1180 = vmatprep.subr.mxu0 %v1051
    %1181 = vmatpush1.msra.mxu0 %v1050
    %1182 = vmatprep.subr.mxu0 %v1055
    %1183 = vmatpush1.msra.mxu0 %v1054
    %1184 = vmatprep.subr.mxu0 %v1059
    %1185 = vmatpush1.msra.mxu0 %v1058
    %1186 = vmatprep.subr.mxu0 %v1063
    %1187 = vmatpush1.msra.mxu0 %v1062
    %1188 = vmatprep.subr.mxu0 %v1067
    %1189 = vmatpush1.msra.mxu0 %v1066
    %1190 = vmatprep.subr.mxu0 %v1071
    %1191 = vmatpush1.msra.mxu0 %v1070
    %1192 = vmatprep.subr.mxu0 %v1075
    %1193 = vmatpush1.msra.mxu0 %v1074
    %1194 = vmatprep.subr.mxu0 %v1079
    %1195 = vmatpush1.msra.mxu0 %v1078
    %1196 = vmatprep.subr.mxu0 %v1083
    %1197 = vmatpush1.msra.mxu0 %v1082
    %1198 = vmatprep.subr.mxu0 0.0
    %1199 = vmatpush1.msra.mxu0 0.0
    %1200 = vmatprep.subr.mxu0 0.0
    %1201 = vmatpush1.msra.mxu0 0.0
    %1202 = vmatprep.subr.mxu0 0.0
    %1203 = vmatpush1.msra.mxu0 0.0
    %1204 = vmatprep.subr.mxu0 0.0
    %1205 = vmatpush1.msra.mxu0 0.0
    %1206 = vmatprep.subr.mxu0 0.0
    %1207 = vmatpush1.msra.mxu0 0.0
    %1208 = vmatprep.subr.mxu0 0.0
    %1209 = vmatpush1.msra.mxu0 0.0
    %1210 = vmatprep.subr.mxu0 0.0
    %1211 = vmatpush1.msra.mxu0 0.0
    %1212 = vmatprep.subr.mxu0 0.0
    %1213 = vmatpush1.msra.mxu0 0.0
    %1214 = vmatprep.subr.mxu0 0.0
    %1215 = vmatpush1.msra.mxu0 0.0
    %1216 = vmatprep.subr.mxu0 0.0
    %1217 = vmatpush1.msra.mxu0 0.0
    %1218 = vmatprep.subr.mxu0 0.0
    %1219 = vmatpush1.msra.mxu0 0.0
    %1220 = vmatprep.subr.mxu0 0.0
    %1221 = vmatpush1.msra.mxu0 0.0
    %1222 = vmatprep.subr.mxu0 0.0
    %1223 = vmatpush1.msra.mxu0 0.0
    %1224 = vmatprep.subr.mxu0 0.0
    %1225 = vmatpush1.msra.mxu0 0.0
    %1226 = vmatprep.subr.mxu0 0.0
    %1227 = vmatpush1.msra.mxu0 0.0
    %1228 = vmatprep.subr.mxu0 0.0
    %1229 = vmatpush1.msra.mxu0 0.0
    %1230 = vmatprep.subr.mxu0 0.0
    %1231 = vmatpush1.msra.mxu0 0.0
    %1232 = vmatprep.subr.mxu0 0.0
    %1233 = vmatpush1.msra.mxu0 0.0
    %1234 = vmatprep.subr.mxu0 0.0
    %1235 = vmatpush1.msra.mxu0 0.0
    %1236 = vmatprep.subr.mxu0 0.0
    %1237 = vmatpush1.msra.mxu0 0.0
    %1238 = vmatprep.subr.mxu0 0.0
    %1239 = vmatpush1.msra.mxu0 0.0
    %1240 = vmatprep.subr.mxu0 0.0
    %1241 = vmatpush1.msra.mxu0 0.0
    %1242 = vmatprep.subr.mxu0 0.0
    %1243 = vmatpush1.msra.mxu0 0.0
    %1244 = vmatprep.mubr.f32.mxu0 0.0
    %1245 = vmatmul.mubr.f32.gmra.mrb[0].mxu0 %v1098
    %v1246 = vpop.f32.mrb[0].mxu0
    %v1247 = vadd.f32 %v1089, %v1246
    %v1248 = vpop.f32.mrb[0].mxu0
    %v1249 = vadd.f32 %v1089, %v1248
    %1250 = vmatprep.mubr.f32.mxu0 0.0
    %1251 = vmatmul.mubr.f32.gmra.mrb[0].mxu0 %v1101
    %v1252 = vpop.f32.mrb[0].mxu0
    %v1253 = vadd.f32 %v1094, %v1252
    %v1254 = vpop.f32.mrb[0].mxu0
    %v1255 = vadd.f32 %v1094, %v1254
    %1256 = vdwg.mxu0
    %v1257 = vmax.f32 %v1170, 0.0
    %v1258 = vmax.f32 %v1172, 0.0
    %v1259 = vmax.f32 %v1247, 0.0
    %v1260 = vmax.f32 %v1249, 0.0
    %v1261 = vmax.f32 %v1176, 0.0
    %v1262 = vmax.f32 %v1178, 0.0
    %v1263 = vmax.f32 %v1253, 0.0
    %v1264 = vmax.f32 %v1255, 0.0
    %s1265 = smul.u32 8, 32
    %s1266 = smul.u32 %s1265, 2
    %s1267 = sshll.u32 %s1266, 4
    %1268 = dma.done [#allocation5], %s1267
    %v1269 = vld [vmem:[%s1] sm:$0xff]
    %v1270 = vld [vmem:[%s1 + $0x8] sm:$0xff]
    %v1271 = vld [vmem:[%s1 + $0x10] sm:$0xff]
    %v1272 = vld [vmem:[%s1 + $0x18] sm:$0xff]
    %v1273 = vld [vmem:[%s1 + $0x20] sm:$0xff]
    %v1274 = vld [vmem:[%s1 + $0x28] sm:$0xff]
    %v1275 = vld [vmem:[%s1 + $0x30] sm:$0x3]
    %v1276 = vld [vmem:[%s1 + $0x38] sm:$0x3]
    %v1277 = vld [vmem:[%s2 + $0x10] sm:$0x1]
    %v1278 = vld [vmem:[#allocation4] sm:$0xff]
    %v1279 = vld [vmem:[#allocation4 + $0x8] sm:$0xff]
    %v1280 = vld [vmem:[#allocation4 + $0x10] sm:$0xff]
    %v1281 = vld [vmem:[#allocation4 + $0x18] sm:$0xff]
    %v1282 = vld [vmem:[#allocation4 + $0x20] sm:$0xff]
    %v1283 = vld [vmem:[#allocation4 + $0x28] sm:$0xff]
    %v1284 = vld [vmem:[#allocation4 + $0x30] sm:$0xff]
    %v1285 = vld [vmem:[#allocation4 + $0x38] sm:$0xff]
    %v1286 = vld [vmem:[#allocation4 + $0x40] sm:$0xff]
    %v1287 = vld [vmem:[#allocation4 + $0x48] sm:$0xff]
    %v1288 = vld [vmem:[#allocation4 + $0x50] sm:$0xff]
    %v1289 = vld [vmem:[#allocation4 + $0x58] sm:$0xff]
    %v1290 = vld [vmem:[#allocation4 + $0x60] sm:$0xff]
    %v1291 = vld [vmem:[#allocation4 + $0x68] sm:$0xff]
    %v1292 = vld [vmem:[#allocation4 + $0x70] sm:$0xff]
    %v1293 = vld [vmem:[#allocation4 + $0x78] sm:$0xff]
    %v1294 = vld [vmem:[#allocation4 + $0x80] sm:$0xff]
    %v1295 = vld [vmem:[#allocation4 + $0x88] sm:$0xff]
    %v1296 = vld [vmem:[#allocation4 + $0x90] sm:$0xff]
    %v1297 = vld [vmem:[#allocation4 + $0x98] sm:$0xff]
    %v1298 = vld [vmem:[#allocation4 + $0xa0] sm:$0xff]
    %v1299 = vld [vmem:[#allocation4 + $0xa8] sm:$0xff]
    %v1300 = vld [vmem:[#allocation4 + $0xb0] sm:$0xff]
    %v1301 = vld [vmem:[#allocation4 + $0xb8] sm:$0xff]
    %v1302 = vld [vmem:[#allocation4 + $0xc0] sm:$0xff]
    %v1303 = vld [vmem:[#allocation4 + $0xc8] sm:$0xff]
    %v1304 = vld [vmem:[#allocation4 + $0xd0] sm:$0xff]
    %v1305 = vld [vmem:[#allocation4 + $0xd8] sm:$0xff]
    %v1306 = vld [vmem:[#allocation4 + $0xe0] sm:$0xff]
    %v1307 = vld [vmem:[#allocation4 + $0xe8] sm:$0xff]
    %v1308 = vld [vmem:[#allocation4 + $0xf0] sm:$0xff]
    %v1309 = vld [vmem:[#allocation4 + $0xf8] sm:$0xff]
    %v1310 = vld [vmem:[#allocation4 + $0x100] sm:$0xff]
    %v1311 = vld [vmem:[#allocation4 + $0x108] sm:$0xff]
    %v1312 = vld [vmem:[#allocation4 + $0x110] sm:$0xff]
    %v1313 = vld [vmem:[#allocation4 + $0x118] sm:$0xff]
    %v1314 = vld [vmem:[#allocation4 + $0x120] sm:$0xff]
    %v1315 = vld [vmem:[#allocation4 + $0x128] sm:$0xff]
    %v1316 = vld [vmem:[#allocation4 + $0x130] sm:$0xff]
    %v1317 = vld [vmem:[#allocation4 + $0x138] sm:$0xff]
    %v1318 = vld [vmem:[#allocation4 + $0x140] sm:$0xff]
    %v1319 = vld [vmem:[#allocation4 + $0x148] sm:$0xff]
    %v1320 = vld [vmem:[#allocation4 + $0x150] sm:$0xff]
    %v1321 = vld [vmem:[#allocation4 + $0x158] sm:$0xff]
    %v1322 = vld [vmem:[#allocation4 + $0x160] sm:$0xff]
    %v1323 = vld [vmem:[#allocation4 + $0x168] sm:$0xff]
    %v1324 = vld [vmem:[#allocation4 + $0x170] sm:$0xff]
    %v1325 = vld [vmem:[#allocation4 + $0x178] sm:$0xff]
    %v1326 = vld [vmem:[#allocation4 + $0x180] sm:$0xff]
    %v1327 = vld [vmem:[#allocation4 + $0x188] sm:$0xff]
    %v1328 = vld [vmem:[#allocation4 + $0x190] sm:$0xff]
    %v1329 = vld [vmem:[#allocation4 + $0x198] sm:$0xff]
    %v1330 = vld [vmem:[#allocation4 + $0x1a0] sm:$0xff]
    %v1331 = vld [vmem:[#allocation4 + $0x1a8] sm:$0xff]
    %v1332 = vld [vmem:[#allocation4 + $0x1b0] sm:$0xff]
    %v1333 = vld [vmem:[#allocation4 + $0x1b8] sm:$0xff]
    %v1334 = vld [vmem:[#allocation4 + $0x1c0] sm:$0xff]
    %v1335 = vld [vmem:[#allocation4 + $0x1c8] sm:$0xff]
    %v1336 = vld [vmem:[#allocation4 + $0x1d0] sm:$0xff]
    %v1337 = vld [vmem:[#allocation4 + $0x1d8] sm:$0xff]
    %v1338 = vld [vmem:[#allocation4 + $0x1e0] sm:$0xff]
    %v1339 = vld [vmem:[#allocation4 + $0x1e8] sm:$0xff]
    %v1340 = vld [vmem:[#allocation4 + $0x1f0] sm:$0xff]
    %v1341 = vld [vmem:[#allocation4 + $0x1f8] sm:$0xff]
    %1342 = vmatprep.subr.mxu0 %v1279
    %1343 = vmatpush1.msra.mxu0 %v1278
    %1344 = vmatprep.subr.mxu0 %v1281
    %1345 = vmatpush1.msra.mxu0 %v1280
    %1346 = vmatprep.subr.mxu0 %v1283
    %1347 = vmatpush1.msra.mxu0 %v1282
    %1348 = vmatprep.subr.mxu0 %v1285
    %1349 = vmatpush1.msra.mxu0 %v1284
    %1350 = vmatprep.subr.mxu0 %v1287
    %1351 = vmatpush1.msra.mxu0 %v1286
    %1352 = vmatprep.subr.mxu0 %v1289
    %1353 = vmatpush1.msra.mxu0 %v1288
    %1354 = vmatprep.subr.mxu0 %v1291
    %1355 = vmatpush1.msra.mxu0 %v1290
    %1356 = vmatprep.subr.mxu0 %v1293
    %1357 = vmatpush1.msra.mxu0 %v1292
    %1358 = vmatprep.subr.mxu0 %v1295
    %1359 = vmatpush1.msra.mxu0 %v1294
    %1360 = vmatprep.subr.mxu0 %v1297
    %1361 = vmatpush1.msra.mxu0 %v1296
    %1362 = vmatprep.subr.mxu0 %v1299
    %1363 = vmatpush1.msra.mxu0 %v1298
    %1364 = vmatprep.subr.mxu0 %v1301
    %1365 = vmatpush1.msra.mxu0 %v1300
    %1366 = vmatprep.subr.mxu0 %v1303
    %1367 = vmatpush1.msra.mxu0 %v1302
    %1368 = vmatprep.subr.mxu0 %v1305
    %1369 = vmatpush1.msra.mxu0 %v1304
    %1370 = vmatprep.subr.mxu0 %v1307
    %1371 = vmatpush1.msra.mxu0 %v1306
    %1372 = vmatprep.subr.mxu0 %v1309
    %1373 = vmatpush1.msra.mxu0 %v1308
    %1374 = vmatprep.subr.mxu0 %v1311
    %1375 = vmatpush1.msra.mxu0 %v1310
    %1376 = vmatprep.subr.mxu0 %v1313
    %1377 = vmatpush1.msra.mxu0 %v1312
    %1378 = vmatprep.subr.mxu0 %v1315
    %1379 = vmatpush1.msra.mxu0 %v1314
    %1380 = vmatprep.subr.mxu0 %v1317
    %1381 = vmatpush1.msra.mxu0 %v1316
    %1382 = vmatprep.subr.mxu0 %v1319
    %1383 = vmatpush1.msra.mxu0 %v1318
    %1384 = vmatprep.subr.mxu0 %v1321
    %1385 = vmatpush1.msra.mxu0 %v1320
    %1386 = vmatprep.subr.mxu0 %v1323
    %1387 = vmatpush1.msra.mxu0 %v1322
    %1388 = vmatprep.subr.mxu0 %v1325
    %1389 = vmatpush1.msra.mxu0 %v1324
    %1390 = vmatprep.subr.mxu0 %v1327
    %1391 = vmatpush1.msra.mxu0 %v1326
    %1392 = vmatprep.subr.mxu0 %v1329
    %1393 = vmatpush1.msra.mxu0 %v1328
    %1394 = vmatprep.subr.mxu0 %v1331
    %1395 = vmatpush1.msra.mxu0 %v1330
    %1396 = vmatprep.subr.mxu0 %v1333
    %1397 = vmatpush1.msra.mxu0 %v1332
    %1398 = vmatprep.subr.mxu0 %v1335
    %1399 = vmatpush1.msra.mxu0 %v1334
    %1400 = vmatprep.subr.mxu0 %v1337
    %1401 = vmatpush1.msra.mxu0 %v1336
    %1402 = vmatprep.subr.mxu0 %v1339
    %1403 = vmatpush1.msra.mxu0 %v1338
    %1404 = vmatprep.subr.mxu0 %v1341
    %1405 = vmatpush1.msra.mxu0 %v1340
    %1406 = vmatprep.mubr.f32.mxu0 %v1258
    %1407 = vmatmul.mubr.f32.gmra.mrb[0].mxu0 %v1257
    %v1408 = vpop.f32.mrb[0].mxu0
    %v1409 = vadd.f32 0.0, %v1408
    %v1410 = vpop.f32.mrb[0].mxu0
    %v1411 = vadd.f32 0.0, %v1410
    %1412 = vmatprep.mubr.f32.mxu0 %v1262
    %1413 = vmatmul.mubr.f32.gmra.mrb[0].mxu0 %v1261
    %v1414 = vpop.f32.mrb[0].mxu0
    %v1415 = vadd.f32 0.0, %v1414
    %v1416 = vpop.f32.mrb[0].mxu0
    %v1417 = vadd.f32 0.0, %v1416
    %1418 = vdwg.mxu0
    %v1419 = vmul.f32 %v1409, %v1269
    %v1420 = vmul.f32 %v1411, %v1270
    %v1421 = vmul.f32 %v1415, %v1271
    %v1422 = vmul.f32 %v1417, %v1272
    %vm1423 = vcmask 261120
    %v1425 = vsel %vm1423, %v1420, 0
    %v1428 = vsel %vm1423, %v1422, 0
    %v1431 = vsel %vm1423, %v1274, 0
    %v1434 = vsel %vm1423, %v1276, 0
    %1436 = vmatprep.subr.mxu0 %v1431
    %1437 = vmatpush1.xpose.msra.mxu0 %v1273
    %1438 = vmatprep.subr.mxu0 %v1434
    %1439 = vmatpush1.xpose.msra.mxu0 %v1275
    %1440 = vmatprep.subr.mxu0 0.0
    %1441 = vmatpush1.xpose.msra.mxu0 0.0
    %1442 = vmatprep.subr.mxu0 0.0
    %1443 = vmatpush1.xpose.msra.mxu0 0.0
    %1444 = vmatprep.subr.mxu0 0.0
    %1445 = vmatpush1.xpose.msra.mxu0 0.0
    %1446 = vmatprep.subr.mxu0 0.0
    %1447 = vmatpush1.xpose.msra.mxu0 0.0
    %1448 = vmatprep.subr.mxu0 0.0
    %1449 = vmatpush1.xpose.msra.mxu0 0.0
    %1450 = vmatprep.subr.mxu0 0.0
    %1451 = vmatpush1.xpose.msra.mxu0 0.0
    %1452 = vmatprep.subr.mxu0 0.0
    %1453 = vmatpush1.xpose.msra.mxu0 0.0
    %1454 = vmatprep.subr.mxu0 0.0
    %1455 = vmatpush1.xpose.msra.mxu0 0.0
    %1456 = vmatprep.subr.mxu0 0.0
    %1457 = vmatpush1.xpose.msra.mxu0 0.0
    %1458 = vmatprep.subr.mxu0 0.0
    %1459 = vmatpush1.xpose.msra.mxu0 0.0
    %1460 = vmatprep.subr.mxu0 0.0
    %1461 = vmatpush1.xpose.msra.mxu0 0.0
    %1462 = vmatprep.subr.mxu0 0.0
    %1463 = vmatpush1.xpose.msra.mxu0 0.0
    %1464 = vmatprep.subr.mxu0 0.0
    %1465 = vmatpush1.xpose.msra.mxu0 0.0
    %1466 = vmatprep.subr.mxu0 0.0
    %1467 = vmatpush1.xpose.msra.mxu0 0.0
    %1468 = vmatprep.subr.mxu0 0.0
    %1469 = vmatpush1.xpose.msra.mxu0 0.0
    %1470 = vmatprep.subr.mxu0 0.0
    %1471 = vmatpush1.xpose.msra.mxu0 0.0
    %1472 = vmatprep.subr.mxu0 0.0
    %1473 = vmatpush1.xpose.msra.mxu0 0.0
    %1474 = vmatprep.subr.mxu0 0.0
    %1475 = vmatpush1.xpose.msra.mxu0 0.0
    %1476 = vmatprep.subr.mxu0 0.0
    %1477 = vmatpush1.xpose.msra.mxu0 0.0
    %1478 = vmatprep.subr.mxu0 0.0
    %1479 = vmatpush1.xpose.msra.mxu0 0.0
    %1480 = vmatprep.subr.mxu0 0.0
    %1481 = vmatpush1.xpose.msra.mxu0 0.0
    %1482 = vmatprep.subr.mxu0 0.0
    %1483 = vmatpush1.xpose.msra.mxu0 0.0
    %1484 = vmatprep.subr.mxu0 0.0
    %1485 = vmatpush1.xpose.msra.mxu0 0.0
    %1486 = vmatprep.subr.mxu0 0.0
    %1487 = vmatpush1.xpose.msra.mxu0 0.0
    %1488 = vmatprep.subr.mxu0 0.0
    %1489 = vmatpush1.xpose.msra.mxu0 0.0
    %1490 = vmatprep.subr.mxu0 0.0
    %1491 = vmatpush1.xpose.msra.mxu0 0.0
    %1492 = vmatprep.subr.mxu0 0.0
    %1493 = vmatpush1.xpose.msra.mxu0 0.0
    %1494 = vmatprep.subr.mxu0 0.0
    %1495 = vmatpush1.xpose.msra.mxu0 0.0
    %1496 = vmatprep.subr.mxu0 0.0
    %1497 = vmatpush1.xpose.msra.mxu0 0.0
    %1498 = vmatprep.subr.mxu0 0.0
    %1499 = vmatpush1.xpose.msra.mxu0 0.0
    %1500 = vmatprep.mubr.f32.mxu0 %v1425
    %1501 = vmatmul.mubr.f32.gmra.mrb[0].mxu0 %v1419
    %v1502 = vpop.f32.mrb[0].mxu0
    %v1503 = vadd.f32 0.0, %v1502
    %v1504 = vpop.f32.mrb[0].mxu0
    %1505 = vmatprep.mubr.f32.mxu0 %v1428
    %1506 = vmatmul.mubr.f32.gmra.mrb[0].mxu0 %v1421
    %v1507 = vpop.f32.mrb[0].mxu0
    %v1508 = vadd.f32 0.0, %v1507
    %v1509 = vpop.f32.mrb[0].mxu0
    %1510 = vdwg.mxu0
    %vm1511 = vcmask 80896
    %v1512 = vsel %vm1511, %v1503, 0.0
    %v1513 = vsel %vm1511, %v1508, 0.0
    %v1514 = vadd.f32 %v1512, %v1513
    %v1515 = vrot.slane %v1514, 4
    %v1516 = vadd.f32 %v1514, %v1515
    %v1517 = vrot.slane %v1516, 2
    %v1518 = vadd.f32 %v1516, %v1517
    %v1519 = vrot.slane %v1518, 1
    %v1520 = vadd.f32 %v1518, %v1519
    %v1521 = vadd.f32 %v1520, %v1277
    %vm1522 = vcmask 73728
    %v1523 = vsel %vm1522, %v1521, -inf
    %1524 = vmax.xlane.f32.xlu0 %v1523
    %v1525 = vpop.xlane.xlu0 %1524
    %v1526 = vsub.f32 %v1521, %v1525
    %v1527 = vmul.f32 %v1526, 1.442695
    %v1528 = vpow.pop %v1527
    %v1529 = vsel %vm1522, %v1528, 0.0
    %1530 = vadd.xlane.f32.xlu0 %v1529
    %v1531 = vpop.xlane.xlu0 %1530
    %v1532 = vrcp.pop %v1531
    %v1533 = vmul.f32 %v1528, %v1532
    %1534 = vst.msk [vmem:[#allocation6] sm:$0x1] %vm1522, %v1533
    %1535 = vmatprep.subr.mxu0 %v1279
    %1536 = vmatpush1.msra.mxu0 %v1278
    %1537 = vmatprep.subr.mxu0 %v1281
    %1538 = vmatpush1.msra.mxu0 %v1280
    %1539 = vmatprep.subr.mxu0 %v1283
    %1540 = vmatpush1.msra.mxu0 %v1282
    %1541 = vmatprep.subr.mxu0 %v1285
    %1542 = vmatpush1.msra.mxu0 %v1284
    %1543 = vmatprep.subr.mxu0 %v1287
    %1544 = vmatpush1.msra.mxu0 %v1286
    %1545 = vmatprep.subr.mxu0 %v1289
    %1546 = vmatpush1.msra.mxu0 %v1288
    %1547 = vmatprep.subr.mxu0 %v1291
    %1548 = vmatpush1.msra.mxu0 %v1290
    %1549 = vmatprep.subr.mxu0 %v1293
    %1550 = vmatpush1.msra.mxu0 %v1292
    %1551 = vmatprep.subr.mxu0 %v1295
    %1552 = vmatpush1.msra.mxu0 %v1294
    %1553 = vmatprep.subr.mxu0 %v1297
    %1554 = vmatpush1.msra.mxu0 %v1296
    %1555 = vmatprep.subr.mxu0 %v1299
    %1556 = vmatpush1.msra.mxu0 %v1298
    %1557 = vmatprep.subr.mxu0 %v1301
    %1558 = vmatpush1.msra.mxu0 %v1300
    %1559 = vmatprep.subr.mxu0 %v1303
    %1560 = vmatpush1.msra.mxu0 %v1302
    %1561 = vmatprep.subr.mxu0 %v1305
    %1562 = vmatpush1.msra.mxu0 %v1304
    %1563 = vmatprep.subr.mxu0 %v1307
    %1564 = vmatpush1.msra.mxu0 %v1306
    %1565 = vmatprep.subr.mxu0 %v1309
    %1566 = vmatpush1.msra.mxu0 %v1308
    %1567 = vmatprep.subr.mxu0 %v1311
    %1568 = vmatpush1.msra.mxu0 %v1310
    %1569 = vmatprep.subr.mxu0 %v1313
    %1570 = vmatpush1.msra.mxu0 %v1312
    %1571 = vmatprep.subr.mxu0 %v1315
    %1572 = vmatpush1.msra.mxu0 %v1314
    %1573 = vmatprep.subr.mxu0 %v1317
    %1574 = vmatpush1.msra.mxu0 %v1316
    %1575 = vmatprep.subr.mxu0 %v1319
    %1576 = vmatpush1.msra.mxu0 %v1318
    %1577 = vmatprep.subr.mxu0 %v1321
    %1578 = vmatpush1.msra.mxu0 %v1320
    %1579 = vmatprep.subr.mxu0 %v1323
    %1580 = vmatpush1.msra.mxu0 %v1322
    %1581 = vmatprep.subr.mxu0 %v1325
    %1582 = vmatpush1.msra.mxu0 %v1324
    %1583 = vmatprep.subr.mxu0 %v1327
    %1584 = vmatpush1.msra.mxu0 %v1326
    %1585 = vmatprep.subr.mxu0 %v1329
    %1586 = vmatpush1.msra.mxu0 %v1328
    %1587 = vmatprep.subr.mxu0 %v1331
    %1588 = vmatpush1.msra.mxu0 %v1330
    %1589 = vmatprep.subr.mxu0 %v1333
    %1590 = vmatpush1.msra.mxu0 %v1332
    %1591 = vmatprep.subr.mxu0 %v1335
    %1592 = vmatpush1.msra.mxu0 %v1334
    %1593 = vmatprep.subr.mxu0 %v1337
    %1594 = vmatpush1.msra.mxu0 %v1336
    %1595 = vmatprep.subr.mxu0 %v1339
    %1596 = vmatpush1.msra.mxu0 %v1338
    %1597 = vmatprep.subr.mxu0 %v1341
    %1598 = vmatpush1.msra.mxu0 %v1340
    %1599 = vmatprep.mubr.f32.mxu0 %v1260
    %1600 = vmatmul.mubr.f32.gmra.mrb[0].mxu0 %v1259
    %v1601 = vpop.f32.mrb[0].mxu0
    %v1602 = vadd.f32 0.0, %v1601
    %v1603 = vpop.f32.mrb[0].mxu0
    %v1604 = vadd.f32 0.0, %v1603
    %1605 = vmatprep.mubr.f32.mxu0 %v1264
    %1606 = vmatmul.mubr.f32.gmra.mrb[0].mxu0 %v1263
    %v1607 = vpop.f32.mrb[0].mxu0
    %v1608 = vadd.f32 0.0, %v1607
    %v1609 = vpop.f32.mrb[0].mxu0
    %v1610 = vadd.f32 0.0, %v1609
    %1611 = vdwg.mxu0
    %v1612 = vmul.f32 %v1602, %v1269
    %v1613 = vmul.f32 %v1604, %v1270
    %v1614 = vmul.f32 %v1608, %v1271
    %v1615 = vmul.f32 %v1610, %v1272
    %v1617 = vsel %vm1423, %v1613, 0
    %v1620 = vsel %vm1423, %v1615, 0
    %1622 = vmatprep.subr.mxu0 %v1431
    %1623 = vmatpush1.xpose.msra.mxu0 %v1273
    %1624 = vmatprep.subr.mxu0 %v1434
    %1625 = vmatpush1.xpose.msra.mxu0 %v1275
    %1626 = vmatprep.subr.mxu0 0.0
    %1627 = vmatpush1.xpose.msra.mxu0 0.0
    %1628 = vmatprep.subr.mxu0 0.0
    %1629 = vmatpush1.xpose.msra.mxu0 0.0
    %1630 = vmatprep.subr.mxu0 0.0
    %1631 = vmatpush1.xpose.msra.mxu0 0.0
    %1632 = vmatprep.subr.mxu0 0.0
    %1633 = vmatpush1.xpose.msra.mxu0 0.0
    %1634 = vmatprep.subr.mxu0 0.0
    %1635 = vmatpush1.xpose.msra.mxu0 0.0
    %1636 = vmatprep.subr.mxu0 0.0
    %1637 = vmatpush1.xpose.msra.mxu0 0.0
    %1638 = vmatprep.subr.mxu0 0.0
    %1639 = vmatpush1.xpose.msra.mxu0 0.0
    %1640 = vmatprep.subr.mxu0 0.0
    %1641 = vmatpush1.xpose.msra.mxu0 0.0
    %1642 = vmatprep.subr.mxu0 0.0
    %1643 = vmatpush1.xpose.msra.mxu0 0.0
    %1644 = vmatprep.subr.mxu0 0.0
    %1645 = vmatpush1.xpose.msra.mxu0 0.0
    %1646 = vmatprep.subr.mxu0 0.0
    %1647 = vmatpush1.xpose.msra.mxu0 0.0
    %1648 = vmatprep.subr.mxu0 0.0
    %1649 = vmatpush1.xpose.msra.mxu0 0.0
    %1650 = vmatprep.subr.mxu0 0.0
    %1651 = vmatpush1.xpose.msra.mxu0 0.0
    %1652 = vmatprep.subr.mxu0 0.0
    %1653 = vmatpush1.xpose.msra.mxu0 0.0
    %1654 = vmatprep.subr.mxu0 0.0
    %1655 = vmatpush1.xpose.msra.mxu0 0.0
    %1656 = vmatprep.subr.mxu0 0.0
    %1657 = vmatpush1.xpose.msra.mxu0 0.0
    %1658 = vmatprep.subr.mxu0 0.0
    %1659 = vmatpush1.xpose.msra.mxu0 0.0
    %1660 = vmatprep.subr.mxu0 0.0
    %1661 = vmatpush1.xpose.msra.mxu0 0.0
    %1662 = vmatprep.subr.mxu0 0.0
    %1663 = vmatpush1.xpose.msra.mxu0 0.0
    %1664 = vmatprep.subr.mxu0 0.0
    %1665 = vmatpush1.xpose.msra.mxu0 0.0
    %1666 = vmatprep.subr.mxu0 0.0
    %1667 = vmatpush1.xpose.msra.mxu0 0.0
    %1668 = vmatprep.subr.mxu0 0.0
    %1669 = vmatpush1.xpose.msra.mxu0 0.0
    %1670 = vmatprep.subr.mxu0 0.0
    %1671 = vmatpush1.xpose.msra.mxu0 0.0
    %1672 = vmatprep.subr.mxu0 0.0
    %1673 = vmatpush1.xpose.msra.mxu0 0.0
    %1674 = vmatprep.subr.mxu0 0.0
    %1675 = vmatpush1.xpose.msra.mxu0 0.0
    %1676 = vmatprep.subr.mxu0 0.0
    %1677 = vmatpush1.xpose.msra.mxu0 0.0
    %1678 = vmatprep.subr.mxu0 0.0
    %1679 = vmatpush1.xpose.msra.mxu0 0.0
    %1680 = vmatprep.subr.mxu0 0.0
    %1681 = vmatpush1.xpose.msra.mxu0 0.0
    %1682 = vmatprep.subr.mxu0 0.0
    %1683 = vmatpush1.xpose.msra.mxu0 0.0
    %1684 = vmatprep.subr.mxu0 0.0
    %1685 = vmatpush1.xpose.msra.mxu0 0.0
    %1686 = vmatprep.mubr.f32.mxu0 %v1617
    %1687 = vmatmul.mubr.f32.gmra.mrb[0].mxu0 %v1612
    %v1688 = vpop.f32.mrb[0].mxu0
    %v1689 = vadd.f32 0.0, %v1688
    %v1690 = vpop.f32.mrb[0].mxu0
    %1691 = vmatprep.mubr.f32.mxu0 %v1620
    %1692 = vmatmul.mubr.f32.gmra.mrb[0].mxu0 %v1614
    %v1693 = vpop.f32.mrb[0].mxu0
    %v1694 = vadd.f32 0.0, %v1693
    %v1695 = vpop.f32.mrb[0].mxu0
    %1696 = vdwg.mxu0
    %v1697 = vsel %vm1511, %v1689, 0.0
    %v1698 = vsel %vm1511, %v1694, 0.0
    %v1699 = vadd.f32 %v1697, %v1698
    %v1700 = vrot.slane %v1699, 4
    %v1701 = vadd.f32 %v1699, %v1700
    %v1702 = vrot.slane %v1701, 2
    %v1703 = vadd.f32 %v1701, %v1702
    %v1704 = vrot.slane %v1703, 1
    %v1705 = vadd.f32 %v1703, %v1704
    %v1706 = vadd.f32 %v1705, %v1277
    %v1707 = vsel %vm1522, %v1706, -inf
    %1708 = vmax.xlane.f32.xlu0 %v1707
    %v1709 = vpop.xlane.xlu0 %1708
    %v1710 = vsub.f32 %v1706, %v1709
    %v1711 = vmul.f32 %v1710, 1.442695
    %v1712 = vpow.pop %v1711
    %v1713 = vsel %vm1522, %v1712, 0.0
    %1714 = vadd.xlane.f32.xlu0 %v1713
    %v1715 = vpop.xlane.xlu0 %1714
    %v1716 = vrcp.pop %v1715
    %v1717 = vmul.f32 %v1712, %v1716
    %1718 = vst.msk [vmem:[#allocation6 + $0x1] sm:$0x1] %vm1522, %v1717
    // Predicated region
    $region48: #{demo_forward.1} parent=1 // pred_check
      _
    $region49: #{demo_forward.1} parent=1 // pred_check_branch
      %1720 = sbr.rel (0) target = $region51
    $region50: #{demo_forward.1} parent=1 // pred_region
      %s1722 = ssub.s32 32, 32
      %1723 = vsyncadd [#allocation7], %s1722
      %s1725 = sshll.u32 [#allocation6], 4
      %s1726 = int_to_ptr.vmem [resolvable:$true] %s1725
      %1728 = dma.vmem_to_hbm [thread:$0]  %s1726, 32, %s4, [#allocation7]
    $region51: #{demo_forward.1} parent=1 // pred_fallthru
      _
    // Predicated region
    $region52: #{demo_forward.1} parent=1 // pred_check
      _
    $region53: #{demo_forward.1} parent=1 // pred_check_branch
      %1730 = sbr.rel (0) target = $region55
    $region54: #{demo_forward.1} parent=1 // pred_region
      %1731 = dma.done [#allocation7], 32
    $region55: #{demo_forward.1} parent=1 // pred_fallthru
      _
    %1732 = vsyncpa [#allocation7], 1
  %1733 = vsyncmov [#allocation5]
  %s1734 = vpop.sfrf %1733
  %p1735 = scmp.eq.s32.totalorder %s1734, 0
  %p1736 = pneg %p1735
  %1738 = shalt.err (%p1736)

</llo_original>
